<compile_context>
chip_gen: v7x
topology: tpu7x:2x2x1
jax: 0.10.0
libtpu: 0.0.40
codegen_flags: <defaults>
</compile_context>

<pallas_src>
import functools
import math

import jax
import jax.numpy as jnp
from jax.experimental import pallas as pl
from jax.experimental.pallas import tpu as pltpu


def _layernorm(x, gamma, beta, eps=1e-5):
    mu = jnp.mean(x, axis=-1, keepdims=True)
    xc = x - mu
    var = jnp.mean(xc * xc, axis=-1, keepdims=True)
    return xc * jax.lax.rsqrt(var + eps) * gamma + beta


def decoder_block_kernel(
    x_ref,
    wqkv_ref, bqkv_ref, wo_ref, bo_ref,
    g1_ref, be1_ref,
    w1_ref, b1_ref, w2_ref, b2_ref,
    g2_ref, be2_ref,
    o_ref,
    qkv_sc, ctx_sc,
    *, num_heads: int, seq_tile: int, ff_tile: int,
):
    f32, bf16 = jnp.float32, jnp.bfloat16
    Bt, S, D = x_ref.shape
    H = num_heads
    Dh = D // H
    T = seq_tile
    n_t = S // T
    M = Bt * S
    Dff = w1_ref.shape[1]
    NEG = jnp.float32(-1e30)

    x = x_ref[...].astype(f32).reshape(M, D)          # residual input (f32)
    x_bf = x.astype(bf16)

    # ---- fused QKV projection -----------------------------------------------
    # 1/sqrt(Dh) is folded into Wq/bq on the host.  Computed in D-wide column
    # chunks so only an (M, D) f32 temp is ever live; QKV activations are kept
    # resident in bf16 scratch (their only consumers are bf16 matmul inputs).
    for c in range(3):
        c0 = c * D
        chunk = jnp.dot(x_bf, wqkv_ref[:, c0:c0 + D], preferred_element_type=f32)
        chunk = chunk + bqkv_ref[:, c0:c0 + D]
        qkv_sc[:, :, c0:c0 + D] = chunk.astype(bf16).reshape(Bt * n_t, T, D)

    # Causal mask for the diagonal KV tile only (hoisted out of all loops).
    row_ids = jax.lax.broadcasted_iota(jnp.int32, (T, T), 0)
    col_ids = jax.lax.broadcasted_iota(jnp.int32, (T, T), 1)
    diag_mask = row_ids >= col_ids

    # ---- masked multi-head self-attention (flash-style, causal block skip) ---
    # batch-row / head / Q-tile loops are short static loops (static lane
    # offsets for the head column slabs); the long KV loop is a lax.fori_loop.
    for b in range(Bt):
        for h in range(H):
            c0 = h * Dh
            kc0 = D + c0
            vc0 = 2 * D + c0
            for qi in range(n_t):
                qt_idx = b * n_t + qi
                q_t = qkv_sc[qt_idx, :, c0:c0 + Dh]   # (T, Dh) bf16, pre-scaled

                def kv_step(j, carry):
                    m_i, l_i, acc = carry
                    idx = b * n_t + j
                    k_t = qkv_sc[idx, :, kc0:kc0 + Dh]            # (T, Dh) bf16
                    v_t = qkv_sc[idx, :, vc0:vc0 + Dh]
                    s = jax.lax.dot_general(q_t, k_t, (((1,), (1,)), ((), ())),
                                            preferred_element_type=f32)
                    m_new = jnp.maximum(m_i, jnp.max(s, axis=-1, keepdims=True))
                    alpha = jnp.exp(m_i - m_new)
                    p = jnp.exp(s - m_new)
                    l_new = alpha * l_i + jnp.sum(p, axis=-1, keepdims=True)
                    acc_new = alpha * acc + jnp.dot(p.astype(bf16), v_t,
                                                    preferred_element_type=f32)
                    return m_new, l_new, acc_new

                carry0 = (jnp.full((T, 1), -jnp.inf, f32),
                          jnp.zeros((T, 1), f32),
                          jnp.zeros((T, Dh), f32))
                # KV tiles strictly below the diagonal: no mask needed.  Tiles
                # above the diagonal are skipped entirely.
                m_i, l_i, acc = jax.lax.fori_loop(0, qi, kv_step, carry0)

                # Diagonal KV tile with the causal mask.
                k_d = qkv_sc[qt_idx, :, kc0:kc0 + Dh]
                v_d = qkv_sc[qt_idx, :, vc0:vc0 + Dh]
                s = jax.lax.dot_general(q_t, k_d, (((1,), (1,)), ((), ())),
                                        preferred_element_type=f32)
                s = jnp.where(diag_mask, s, NEG)
                m_new = jnp.maximum(m_i, jnp.max(s, axis=-1, keepdims=True))
                alpha = jnp.exp(m_i - m_new)
                p = jnp.exp(s - m_new)
                l_i = alpha * l_i + jnp.sum(p, axis=-1, keepdims=True)
                acc = alpha * acc + jnp.dot(p.astype(bf16), v_d,
                                            preferred_element_type=f32)

                att = acc * pl.reciprocal(l_i, approx=True)       # (T, Dh) f32
                ctx_sc[qt_idx, :, c0:c0 + Dh] = att.astype(bf16)

    # ---- output projection: one full-K (K = D) matmul -------------------------
    ctx = ctx_sc[...].reshape(M, D)                               # (M, D) bf16
    att_out = jnp.dot(ctx, wo_ref[...], preferred_element_type=f32) + bo_ref[...]

    y = _layernorm(x + att_out, g1_ref[...], be1_ref[...])        # residual + LN (f32)

    # ---- feed forward, tiled over Dff (never a full (M, Dff) f32 hidden) ------
    y_bf = y.astype(bf16)
    h2 = jnp.zeros((M, D), f32)
    for f0 in range(0, Dff, ff_tile):
        h1_c = jnp.dot(y_bf, w1_ref[:, f0:f0 + ff_tile], preferred_element_type=f32)
        h1_c = jnp.maximum(h1_c + b1_ref[:, f0:f0 + ff_tile], 0.0)
        h2 = h2 + jnp.dot(h1_c.astype(bf16), w2_ref[f0:f0 + ff_tile, :],
                          preferred_element_type=f32)
    h2 = h2 + b2_ref[...]

    z = _layernorm(y + h2, g2_ref[...], be2_ref[...])             # residual + LN (f32)
    o_ref[...] = z.reshape(Bt, S, D).astype(o_ref.dtype)


def _largest_divisor_leq(n: int, cap: int) -> int:
    d = max(1, min(n, cap))
    while n % d:
        d -= 1
    return d


def _pick_block_b(B: int, S: int) -> int:
    # Target a few hundred matmul rows per grid step, but keep >= 2 "parallel"
    # steps when B allows so both v7x TensorCores get work.
    bt = max(1, min(B, 256 // max(S, 1)))
    while B % bt:
        bt -= 1
    if bt > 1 and B // bt < 2:
        bt = max(1, bt // 2)
        while B % bt:
            bt -= 1
    return bt


def _vmem_capacity_bytes(default: int = 128 << 20) -> int:
    """Generation-aware physical VMEM size (v5e/v6e 128 MiB, v7x 64 MiB)."""
    get_info = getattr(pltpu, "get_tpu_info", None)
    if get_info is None:
        return default
    try:
        cap = getattr(get_info(), "vmem_capacity_bytes", None)
        return int(cap) if cap else default
    except Exception:
        # Narrow capability probe only; never wraps the kernel build itself.
        return default


def _vmem_limit_bytes(bt, S, D, Dff, single_buffer_weights):
    M = bt * S
    wbuf = 1 if single_buffer_weights else 2
    weights = wbuf * 2 * (3 * D * D + D * D + 2 * D * Dff)   # bf16 weights
    biases = wbuf * 4 * (3 * D + Dff + 8 * D)                # f32 biases / LN params
    io = 2 * 2 * M * D * 4                                   # x + out, double-buffered
    scratch = M * 4 * D * 2                                  # qkv + ctx bf16 scratch
    temps = 6 * M * D * 4                                    # rough live f32 temporaries
    budget = weights + biases + io + scratch + temps
    cap = _vmem_capacity_bytes()
    return int(min(max(2 * budget, 32 << 20), int(0.9 * cap)))


def _weight_specs(D, Dff, single_buffer):
    def ws(shape):
        if single_buffer:
            # Constant index_map -> never re-fetched; 1 buffer halves weight VMEM.
            return pl.BlockSpec(shape, lambda b: (0, 0), pipeline_mode=pl.Buffered(1))
        return pl.BlockSpec(shape, lambda b: (0, 0))
    return [
        ws((D, 3 * D)), ws((1, 3 * D)),     # wqkv, bqkv
        ws((D, D)), ws((1, D)),             # wo, bo
        ws((1, D)), ws((1, D)),             # ln1 gamma, beta
        ws((D, Dff)), ws((1, Dff)),         # w1, b1
        ws((Dff, D)), ws((1, D)),           # w2, b2
        ws((1, D)), ws((1, D)),             # ln2 gamma, beta
    ]


def _build_block_call(B, S, D, Dff, num_heads, bt, seq_tile, ff_tile, out_dtype,
                      single_buffer_weights):
    n_t = S // seq_tile
    kernel = functools.partial(decoder_block_kernel, num_heads=num_heads,
                               seq_tile=seq_tile, ff_tile=ff_tile)
    in_specs = ([pl.BlockSpec((bt, S, D), lambda b: (b, 0, 0))]
                + _weight_specs(D, Dff, single_buffer_weights))
    return pl.pallas_call(
        kernel,
        out_shape=jax.ShapeDtypeStruct((B, S, D), out_dtype),
        grid_spec=pltpu.PrefetchScalarGridSpec(
            num_scalar_prefetch=0,
            grid=(B // bt,),
            in_specs=in_specs,
            out_specs=pl.BlockSpec((bt, S, D), lambda b: (b, 0, 0)),
            scratch_shapes=[
                pltpu.VMEM((bt * n_t, seq_tile, 3 * D), jnp.bfloat16),  # QKV (bf16)
                pltpu.VMEM((bt * n_t, seq_tile, D), jnp.bfloat16),      # per-head ctx
            ],
        ),
        compiler_params=pltpu.CompilerParams(
            dimension_semantics=("parallel",),
            vmem_limit_bytes=_vmem_limit_bytes(bt, S, D, Dff, single_buffer_weights),
        ),
    )


def pack_block_params(p, num_heads):
    """Pack torch-style per-matrix params into the kernel's fused/bf16 layout.

    The attention scale 1/sqrt(Dh) is folded into Wq/bq here so q never needs a
    separate scale multiply (and never a second f32 copy) in the kernel.
    """
    bf16, f32 = jnp.bfloat16, jnp.float32
    D = p["wq"].shape[0]
    scale = 1.0 / math.sqrt(D // num_heads)
    wqkv = jnp.concatenate([p["wq"] * scale, p["wk"], p["wv"]], axis=1)
    bqkv = jnp.concatenate([p["bq"] * scale, p["bk"], p["bv"]], axis=1)
    return {
        "wqkv": wqkv.astype(bf16), "bqkv": bqkv.astype(f32),
        "wo": p["wo"].astype(bf16), "bo": p["bo"].astype(f32),
        "ln1_g": p["ln1_g"].astype(f32), "ln1_b": p["ln1_b"].astype(f32),
        "w1": p["w1"].astype(bf16), "b1": p["b1"].astype(f32),
        "w2": p["w2"].astype(bf16), "b2": p["b2"].astype(f32),
        "ln2_g": p["ln2_g"].astype(f32), "ln2_b": p["ln2_b"].astype(f32),
    }


def gpt_decoder_block(x, packed, num_heads, *, block_b=None, out_dtype=None,
                      single_buffer_weights=False):
    """One GPTDecoderBlock forward. x: (B, S, D)."""
    B, S, D = x.shape
    assert D % num_heads == 0
    Dff = packed["w1"].shape[1]
    bt = _pick_block_b(B, S) if block_b is None else block_b
    assert B % bt == 0
    seq_tile = _largest_divisor_leq(S, 512)   # always a divisor of S (no (S,S) fallback)
    ff_tile = _largest_divisor_leq(Dff, 2048)
    out_dtype = x.dtype if out_dtype is None else out_dtype
    call = _build_block_call(B, S, D, Dff, num_heads, bt, seq_tile, ff_tile,
                             out_dtype, single_buffer_weights)
    return call(x,
                packed["wqkv"], packed["bqkv"], packed["wo"], packed["bo"],
                packed["ln1_g"], packed["ln1_b"],
                packed["w1"], packed["b1"], packed["w2"], packed["b2"],
                packed["ln2_g"], packed["ln2_b"])


def gpt_decoder(x, layer_params, num_heads, interlayer_dtype=None):
    """GPTDecoder forward: N sequential decoder blocks.

    interlayer_dtype=jnp.bfloat16 halves the HBM activation round trip between
    layers (worth it on v5e/v6e); the final layer always returns x.dtype.
    """
    final_dtype = x.dtype
    n = len(layer_params)
    for i, p in enumerate(layer_params):
        out_dt = final_dtype if (interlayer_dtype is None or i == n - 1) else interlayer_dtype
        x = gpt_decoder_block(x, pack_block_params(p, num_heads), num_heads,
                              out_dtype=out_dt)
    return x


def init_block_params(key, d_model, dtype=jnp.float32):
    dff = 4 * d_model
    ks = jax.random.split(key, 6)
    scale = 0.02
    return {
        "wq": jax.random.normal(ks[0], (d_model, d_model), dtype) * scale,
        "wk": jax.random.normal(ks[1], (d_model, d_model), dtype) * scale,
        "wv": jax.random.normal(ks[2], (d_model, d_model), dtype) * scale,
        "wo": jax.random.normal(ks[3], (d_model, d_model), dtype) * scale,
        "bq": jnp.zeros((1, d_model), dtype),
        "bk": jnp.zeros((1, d_model), dtype),
        "bv": jnp.zeros((1, d_model), dtype),
        "bo": jnp.zeros((1, d_model), dtype),
        "ln1_g": jnp.ones((1, d_model), dtype),
        "ln1_b": jnp.zeros((1, d_model), dtype),
        "w1": jax.random.normal(ks[4], (d_model, dff), dtype) * scale,
        "b1": jnp.zeros((1, dff), dtype),
        "w2": jax.random.normal(ks[5], (dff, d_model), dtype) * scale,
        "b2": jnp.zeros((1, d_model), dtype),
        "ln2_g": jnp.ones((1, d_model), dtype),
        "ln2_b": jnp.zeros((1, d_model), dtype),
    }


def _reference_block(x, p, num_heads):
    """Pure-JAX reference with the same bf16-matmul / f32-everything-else policy."""
    f32, bf16 = jnp.float32, jnp.bfloat16
    mm = lambda a, b: jnp.dot(a.astype(bf16), b.astype(bf16), preferred_element_type=f32)
    B, S, D = x.shape
    H = num_heads
    Dh = D // H
    scale = 1.0 / math.sqrt(Dh)

    wqkv = jnp.concatenate([p["wq"], p["wk"], p["wv"]], axis=1)
    bqkv = jnp.concatenate([p["bq"], p["bk"], p["bv"]], axis=1)
    x2 = x.reshape(B * S, D).astype(f32)
    qkv = (mm(x2, wqkv) + bqkv).reshape(B, S, 3, H, Dh)
    q = jnp.transpose(qkv[:, :, 0], (0, 2, 1, 3)) * scale
    k = jnp.transpose(qkv[:, :, 1], (0, 2, 1, 3))
    v = jnp.transpose(qkv[:, :, 2], (0, 2, 1, 3))
    s = jnp.einsum("bhqd,bhkd->bhqk", q.astype(bf16), k.astype(bf16),
                   preferred_element_type=f32)
    mask = jnp.tril(jnp.ones((S, S), bool))
    s = jnp.where(mask, s, -1e30)
    pr = jax.nn.softmax(s, axis=-1)
    ctx = jnp.einsum("bhqk,bhkd->bhqd", pr.astype(bf16), v.astype(bf16),
                     preferred_element_type=f32)
    ctx = jnp.transpose(ctx, (0, 2, 1, 3)).reshape(B * S, D)
    att = mm(ctx, p["wo"]) + p["bo"]

    y = _layernorm(x2 + att, p["ln1_g"], p["ln1_b"])
    h1 = jnp.maximum(mm(y, p["w1"]) + p["b1"], 0.0)
    h2 = mm(h1, p["w2"]) + p["b2"]
    z = _layernorm(y + h2, p["ln2_g"], p["ln2_b"])
    return z.reshape(B, S, D)


if __name__ == "__main__":
    # Small shapes consistent with GPTDecoder(d_model, N, vocab_len, num_heads)
    d_model = 32
    N = 2
    vocab_len = 16          # max sequence length for the causal mask in the torch module
    num_heads = 2
    batch, seq = 2, 8       # seq <= vocab_len

    key = jax.random.PRNGKey(0)
    kx, *kls = jax.random.split(key, N + 1)
    x = jax.random.normal(kx, (batch, seq, d_model), jnp.float32)  # (B, S, D)
    layer_params = [init_block_params(k, d_model) for k in kls]

    out = gpt_decoder(x, layer_params, num_heads)
    out = jax.block_until_ready(out)

    ref = x
    for p in layer_params:
        ref = _reference_block(ref, p, num_heads)

    assert out.shape == (batch, seq, d_model)
    assert bool(jnp.all(jnp.isfinite(out)))
    err = float(jnp.max(jnp.abs(out - ref)))
    assert jnp.allclose(out, ref, atol=5e-2, rtol=5e-2), err
    print("KERNEL_OK")
</pallas_src>

<mosaic_0001>
module attributes {stable_mosaic.version = 11 : i64} {
  func.func @decoder_block_kernel(%arg0: i32, %arg1: memref<1x8x32xf32, #tpu.memory_space<vmem>>, %arg2: memref<32x96xbf16, #tpu.memory_space<vmem>>, %arg3: memref<1x96xf32, #tpu.memory_space<vmem>>, %arg4: memref<32x32xbf16, #tpu.memory_space<vmem>>, %arg5: memref<1x32xf32, #tpu.memory_space<vmem>>, %arg6: memref<1x32xf32, #tpu.memory_space<vmem>>, %arg7: memref<1x32xf32, #tpu.memory_space<vmem>>, %arg8: memref<32x128xbf16, #tpu.memory_space<vmem>>, %arg9: memref<1x128xf32, #tpu.memory_space<vmem>>, %arg10: memref<128x32xbf16, #tpu.memory_space<vmem>>, %arg11: memref<1x32xf32, #tpu.memory_space<vmem>>, %arg12: memref<1x32xf32, #tpu.memory_space<vmem>>, %arg13: memref<1x32xf32, #tpu.memory_space<vmem>>, %arg14: memref<1x8x32xf32, #tpu.memory_space<vmem>>, %arg15: memref<1x8x96xbf16, #tpu.memory_space<vmem>>, %arg16: memref<1x8x32xbf16, #tpu.memory_space<vmem>>) attributes {dimension_semantics = [#tpu.dimension_semantics<parallel>], iteration_bounds = array<i64: 2>, scalar_prefetch = 0 : i64, scratch_operands = 2 : i64, tpu.core_type = #tpu.core_type<tc>, window_params = [{transform_indices = @transform_0, window_bounds = array<i64: 1, 8, 32>}, {pipeline_mode = #tpu.pipeline_mode<synchronous>, transform_indices = @transform_1, window_bounds = array<i64: 32, 96>}, {pipeline_mode = #tpu.pipeline_mode<synchronous>, transform_indices = @transform_2, window_bounds = array<i64: 1, 96>}, {pipeline_mode = #tpu.pipeline_mode<synchronous>, transform_indices = @transform_3, window_bounds = array<i64: 32, 32>}, {pipeline_mode = #tpu.pipeline_mode<synchronous>, transform_indices = @transform_4, window_bounds = array<i64: 1, 32>}, {pipeline_mode = #tpu.pipeline_mode<synchronous>, transform_indices = @transform_5, window_bounds = array<i64: 1, 32>}, {pipeline_mode = #tpu.pipeline_mode<synchronous>, transform_indices = @transform_6, window_bounds = array<i64: 1, 32>}, {pipeline_mode = #tpu.pipeline_mode<synchronous>, transform_indices = @transform_7, window_bounds = array<i64: 32, 128>}, {pipeline_mode = #tpu.pipeline_mode<synchronous>, transform_indices = @transform_8, window_bounds = array<i64: 1, 128>}, {pipeline_mode = #tpu.pipeline_mode<synchronous>, transform_indices = @transform_9, window_bounds = array<i64: 128, 32>}, {pipeline_mode = #tpu.pipeline_mode<synchronous>, transform_indices = @transform_10, window_bounds = array<i64: 1, 32>}, {pipeline_mode = #tpu.pipeline_mode<synchronous>, transform_indices = @transform_11, window_bounds = array<i64: 1, 32>}, {pipeline_mode = #tpu.pipeline_mode<synchronous>, transform_indices = @transform_12, window_bounds = array<i64: 1, 32>}, {transform_indices = @transform_13, window_bounds = array<i64: 1, 8, 32>}]} {
    %c0 = arith.constant 0 : index
    %c0_0 = arith.constant 0 : index
    %c0_1 = arith.constant 0 : index
    %0 = vector.load %arg1[%c0, %c0_0, %c0_1] : memref<1x8x32xf32, #tpu.memory_space<vmem>>, vector<1x8x32xf32>
    %1 = vector.shape_cast %0 : vector<1x8x32xf32> to vector<8x32xf32>
    %2 = arith.truncf %1 : vector<8x32xf32> to vector<8x32xbf16>
    %c0_2 = arith.constant 0 : index
    %c0_3 = arith.constant 0 : index
    %3 = vector.load %arg2[%c0_2, %c0_3] : memref<32x96xbf16, #tpu.memory_space<vmem>>, vector<32x32xbf16>
    %cst = arith.constant dense<0.000000e+00> : vector<8x32xf32>
    %4 = tpu.matmul %2, %3, %cst {dimension_numbers = #tpu.dot_dimension_numbers<[1], [0], [0], [1], [0, 0, 1, 1], [], []>} : vector<8x32xbf16>, vector<32x32xbf16>, vector<8x32xf32> -> vector<8x32xf32>
    %c0_4 = arith.constant 0 : index
    %c0_5 = arith.constant 0 : index
    %5 = vector.load %arg3[%c0_4, %c0_5] : memref<1x96xf32, #tpu.memory_space<vmem>>, vector<1x32xf32>
    %6 = vector.broadcast %5 : vector<1x32xf32> to vector<8x32xf32>
    %7 = arith.addf %4, %6 : vector<8x32xf32>
    %8 = arith.truncf %7 : vector<8x32xf32> to vector<8x32xbf16>
    %9 = vector.shape_cast %8 : vector<8x32xbf16> to vector<1x8x32xbf16>
    %c0_6 = arith.constant 0 : index
    %c0_7 = arith.constant 0 : index
    %c0_8 = arith.constant 0 : index
    %10 = vector.load %arg15[%c0_6, %c0_7, %c0_8] : memref<1x8x96xbf16, #tpu.memory_space<vmem>>, vector<1x8x32xbf16>
    tpu.vector_store %arg15[%c0_6, %c0_7, %c0_8], %9 {strides = array<i32>} : memref<1x8x96xbf16, #tpu.memory_space<vmem>>, vector<1x8x32xbf16>,
    %c0_9 = arith.constant 0 : index
    %c32 = arith.constant 32 : index
    %11 = vector.load %arg2[%c0_9, %c32] : memref<32x96xbf16, #tpu.memory_space<vmem>>, vector<32x32xbf16>
    %cst_10 = arith.constant dense<0.000000e+00> : vector<8x32xf32>
    %12 = tpu.matmul %2, %11, %cst_10 {dimension_numbers = #tpu.dot_dimension_numbers<[1], [0], [0], [1], [0, 0, 1, 1], [], []>} : vector<8x32xbf16>, vector<32x32xbf16>, vector<8x32xf32> -> vector<8x32xf32>
    %c0_11 = arith.constant 0 : index
    %c32_12 = arith.constant 32 : index
    %13 = vector.load %arg3[%c0_11, %c32_12] : memref<1x96xf32, #tpu.memory_space<vmem>>, vector<1x32xf32>
    %14 = vector.broadcast %13 : vector<1x32xf32> to vector<8x32xf32>
    %15 = arith.addf %12, %14 : vector<8x32xf32>
    %16 = arith.truncf %15 : vector<8x32xf32> to vector<8x32xbf16>
    %17 = vector.shape_cast %16 : vector<8x32xbf16> to vector<1x8x32xbf16>
    %c0_13 = arith.constant 0 : index
    %c0_14 = arith.constant 0 : index
    %c32_15 = arith.constant 32 : index
    %18 = vector.load %arg15[%c0_13, %c0_14, %c32_15] : memref<1x8x96xbf16, #tpu.memory_space<vmem>>, vector<1x8x32xbf16>
    tpu.vector_store %arg15[%c0_13, %c0_14, %c32_15], %17 {strides = array<i32>} : memref<1x8x96xbf16, #tpu.memory_space<vmem>>, vector<1x8x32xbf16>,
    %c0_16 = arith.constant 0 : index
    %c64 = arith.constant 64 : index
    %19 = vector.load %arg2[%c0_16, %c64] : memref<32x96xbf16, #tpu.memory_space<vmem>>, vector<32x32xbf16>
    %cst_17 = arith.constant dense<0.000000e+00> : vector<8x32xf32>
    %20 = tpu.matmul %2, %19, %cst_17 {dimension_numbers = #tpu.dot_dimension_numbers<[1], [0], [0], [1], [0, 0, 1, 1], [], []>} : vector<8x32xbf16>, vector<32x32xbf16>, vector<8x32xf32> -> vector<8x32xf32>
    %c0_18 = arith.constant 0 : index
    %c64_19 = arith.constant 64 : index
    %21 = vector.load %arg3[%c0_18, %c64_19] : memref<1x96xf32, #tpu.memory_space<vmem>>, vector<1x32xf32>
    %22 = vector.broadcast %21 : vector<1x32xf32> to vector<8x32xf32>
    %23 = arith.addf %20, %22 : vector<8x32xf32>
    %24 = arith.truncf %23 : vector<8x32xf32> to vector<8x32xbf16>
    %25 = vector.shape_cast %24 : vector<8x32xbf16> to vector<1x8x32xbf16>
    %c0_20 = arith.constant 0 : index
    %c0_21 = arith.constant 0 : index
    %c64_22 = arith.constant 64 : index
    %26 = vector.load %arg15[%c0_20, %c0_21, %c64_22] : memref<1x8x96xbf16, #tpu.memory_space<vmem>>, vector<1x8x32xbf16>
    tpu.vector_store %arg15[%c0_20, %c0_21, %c64_22], %25 {strides = array<i32>} : memref<1x8x96xbf16, #tpu.memory_space<vmem>>, vector<1x8x32xbf16>,
    %27 = tpu.iota {dimensions = array<i32: 0>} : vector<8x8xi32>
    %28 = tpu.iota {dimensions = array<i32: 1>} : vector<8x8xi32>
    %29 = arith.cmpi sge, %27, %28 : vector<8x8xi32>
    %c0_23 = arith.constant 0 : index
    %c0_24 = arith.constant 0 : index
    %c0_25 = arith.constant 0 : index
    %30 = vector.load %arg15[%c0_23, %c0_24, %c0_25] : memref<1x8x96xbf16, #tpu.memory_space<vmem>>, vector<1x8x16xbf16>
    %31 = vector.shape_cast %30 : vector<1x8x16xbf16> to vector<8x16xbf16>
    %cst_26 = arith.constant 0xFF800000 : f32
    %32 = vector.broadcast %cst_26 : f32 to vector<8x1xf32>
    %cst_27 = arith.constant 0.000000e+00 : f32
    %33 = vector.broadcast %cst_27 : f32 to vector<8x1xf32>
    %cst_28 = arith.constant 0.000000e+00 : f32
    %34 = vector.broadcast %cst_28 : f32 to vector<8x16xf32>
    %c0_i32 = arith.constant 0 : i32
    %c0_i32_29 = arith.constant 0 : i32
    %35 = arith.addi %c0_i32, %c0_i32_29 : i32
    %c1_i32 = arith.constant 1 : i32
    %36:3 = scf.for %arg17 = %c0_i32 to %35 step %c1_i32 iter_args(%arg18 = %32, %arg19 = %33, %arg20 = %34) -> (vector<8x1xf32>, vector<8x1xf32>, vector<8x16xf32>)  : i32 {
      %c0_i32_107 = arith.constant 0 : i32
      %177 = arith.addi %c0_i32_107, %arg17 : i32
      %178 = arith.index_cast %177 : i32 to index
      %c0_108 = arith.constant 0 : index
      %c32_109 = arith.constant 32 : index
      %179 = vector.load %arg15[%178, %c0_108, %c32_109] : memref<1x8x96xbf16, #tpu.memory_space<vmem>>, vector<1x8x16xbf16>
      %180 = vector.shape_cast %179 : vector<1x8x16xbf16> to vector<8x16xbf16>
      %181 = arith.index_cast %177 : i32 to index
      %c0_110 = arith.constant 0 : index
      %c64_111 = arith.constant 64 : index
      %182 = vector.load %arg15[%181, %c0_110, %c64_111] : memref<1x8x96xbf16, #tpu.memory_space<vmem>>, vector<1x8x16xbf16>
      %183 = vector.shape_cast %182 : vector<1x8x16xbf16> to vector<8x16xbf16>
      %cst_112 = arith.constant dense<0.000000e+00> : vector<8x8xf32>
      %184 = tpu.matmul %31, %180, %cst_112 {dimension_numbers = #tpu.dot_dimension_numbers<[1], [1], [0], [0], [0, 0, 1, 0], [], []>} : vector<8x16xbf16>, vector<8x16xbf16>, vector<8x8xf32> -> vector<8x8xf32>
      %cst_113 = arith.constant dense<0xFF800000> : vector<8xf32>
      %185 = vector.multi_reduction <maximumf>, %184, %cst_113 [1] : vector<8x8xf32> to vector<8xf32>
      %186 = vector.shape_cast %185 : vector<8xf32> to vector<8x1xf32>
      %187 = arith.maximumf %arg18, %186 : vector<8x1xf32>
      %188 = arith.subf %arg18, %187 : vector<8x1xf32>
      %189 = math.exp %188 : vector<8x1xf32>
      %190 = vector.broadcast %187 : vector<8x1xf32> to vector<8x8xf32>
      %191 = arith.subf %184, %190 : vector<8x8xf32>
      %192 = math.exp %191 : vector<8x8xf32>
      %193 = arith.mulf %189, %arg19 : vector<8x1xf32>
      %cst_114 = arith.constant dense<0.000000e+00> : vector<8xf32>
      %194 = vector.multi_reduction <add>, %192, %cst_114 [1] : vector<8x8xf32> to vector<8xf32>
      %195 = vector.shape_cast %194 : vector<8xf32> to vector<8x1xf32>
      %196 = arith.addf %193, %195 : vector<8x1xf32>
      %197 = vector.broadcast %189 : vector<8x1xf32> to vector<8x16xf32>
      %198 = arith.mulf %197, %arg20 : vector<8x16xf32>
      %199 = arith.truncf %192 : vector<8x8xf32> to vector<8x8xbf16>
      %cst_115 = arith.constant dense<0.000000e+00> : vector<8x16xf32>
      %200 = tpu.matmul %199, %183, %cst_115 {dimension_numbers = #tpu.dot_dimension_numbers<[1], [0], [0], [1], [0, 0, 1, 1], [], []>} : vector<8x8xbf16>, vector<8x16xbf16>, vector<8x16xf32> -> vector<8x16xf32>
      %201 = arith.addf %198, %200 : vector<8x16xf32>
      scf.yield %187, %196, %201 : vector<8x1xf32>, vector<8x1xf32>, vector<8x16xf32>
    }
    %c0_i32_30 = arith.constant 0 : i32
    %c0_31 = arith.constant 0 : index
    %c0_32 = arith.constant 0 : index
    %c32_33 = arith.constant 32 : index
    %37 = vector.load %arg15[%c0_31, %c0_32, %c32_33] : memref<1x8x96xbf16, #tpu.memory_space<vmem>>, vector<1x8x16xbf16>
    %38 = vector.shape_cast %37 : vector<1x8x16xbf16> to vector<8x16xbf16>
    %c0_34 = arith.constant 0 : index
    %c0_35 = arith.constant 0 : index
    %c64_36 = arith.constant 64 : index
    %39 = vector.load %arg15[%c0_34, %c0_35, %c64_36] : memref<1x8x96xbf16, #tpu.memory_space<vmem>>, vector<1x8x16xbf16>
    %40 = vector.shape_cast %39 : vector<1x8x16xbf16> to vector<8x16xbf16>
    %cst_37 = arith.constant dense<0.000000e+00> : vector<8x8xf32>
    %41 = tpu.matmul %31, %38, %cst_37 {dimension_numbers = #tpu.dot_dimension_numbers<[1], [1], [0], [0], [0, 0, 1, 0], [], []>} : vector<8x16xbf16>, vector<8x16xbf16>, vector<8x8xf32> -> vector<8x8xf32>
    %cst_38 = arith.constant -1.000000e+30 : f32
    %42 = vector.broadcast %cst_38 : f32 to vector<8x8xf32>
    %43 = arith.select %29, %41, %42 : vector<8x8xi1>, vector<8x8xf32>
    %cst_39 = arith.constant dense<0xFF800000> : vector<8xf32>
    %44 = vector.multi_reduction <maximumf>, %43, %cst_39 [1] : vector<8x8xf32> to vector<8xf32>
    %45 = vector.shape_cast %44 : vector<8xf32> to vector<8x1xf32>
    %46 = arith.maximumf %36#0, %45 : vector<8x1xf32>
    %47 = arith.subf %36#0, %46 : vector<8x1xf32>
    %48 = math.exp %47 : vector<8x1xf32>
    %49 = vector.broadcast %46 : vector<8x1xf32> to vector<8x8xf32>
    %50 = arith.subf %43, %49 : vector<8x8xf32>
    %51 = math.exp %50 : vector<8x8xf32>
    %52 = arith.mulf %48, %36#1 : vector<8x1xf32>
    %cst_40 = arith.constant dense<0.000000e+00> : vector<8xf32>
    %53 = vector.multi_reduction <add>, %51, %cst_40 [1] : vector<8x8xf32> to vector<8xf32>
    %54 = vector.shape_cast %53 : vector<8xf32> to vector<8x1xf32>
    %55 = arith.addf %52, %54 : vector<8x1xf32>
    %56 = vector.broadcast %48 : vector<8x1xf32> to vector<8x16xf32>
    %57 = arith.mulf %56, %36#2 : vector<8x16xf32>
    %58 = arith.truncf %51 : vector<8x8xf32> to vector<8x8xbf16>
    %cst_41 = arith.constant dense<0.000000e+00> : vector<8x16xf32>
    %59 = tpu.matmul %58, %40, %cst_41 {dimension_numbers = #tpu.dot_dimension_numbers<[1], [0], [0], [1], [0, 0, 1, 1], [], []>} : vector<8x8xbf16>, vector<8x16xbf16>, vector<8x16xf32> -> vector<8x16xf32>
    %60 = arith.addf %57, %59 : vector<8x16xf32>
    %61 = tpu.reciprocal %55 {approx = true} : vector<8x1xf32> -> vector<8x1xf32>
    %62 = vector.broadcast %61 : vector<8x1xf32> to vector<8x16xf32>
    %63 = arith.mulf %60, %62 : vector<8x16xf32>
    %64 = arith.truncf %63 : vector<8x16xf32> to vector<8x16xbf16>
    %c0_42 = arith.constant 0 : index
    %c0_43 = arith.constant 0 : index
    %c0_44 = arith.constant 0 : index
    %65 = vector.load %arg16[%c0_42, %c0_43, %c0_44] : memref<1x8x32xbf16, #tpu.memory_space<vmem>>, vector<1x8x16xbf16>
    %66 = vector.shape_cast %65 : vector<1x8x16xbf16> to vector<8x16xbf16>
    %67 = vector.shape_cast %64 : vector<8x16xbf16> to vector<1x8x16xbf16>
    tpu.vector_store %arg16[%c0_42, %c0_43, %c0_44], %67 {strides = array<i32>} : memref<1x8x32xbf16, #tpu.memory_space<vmem>>, vector<1x8x16xbf16>,
    %c0_45 = arith.constant 0 : index
    %c0_46 = arith.constant 0 : index
    %c16 = arith.constant 16 : index
    %68 = vector.load %arg15[%c0_45, %c0_46, %c16] : memref<1x8x96xbf16, #tpu.memory_space<vmem>>, vector<1x8x16xbf16>
    %69 = vector.shape_cast %68 : vector<1x8x16xbf16> to vector<8x16xbf16>
    %cst_47 = arith.constant 0xFF800000 : f32
    %70 = vector.broadcast %cst_47 : f32 to vector<8x1xf32>
    %cst_48 = arith.constant 0.000000e+00 : f32
    %71 = vector.broadcast %cst_48 : f32 to vector<8x1xf32>
    %cst_49 = arith.constant 0.000000e+00 : f32
    %72 = vector.broadcast %cst_49 : f32 to vector<8x16xf32>
    %c0_i32_50 = arith.constant 0 : i32
    %c0_i32_51 = arith.constant 0 : i32
    %73 = arith.addi %c0_i32_50, %c0_i32_51 : i32
    %c1_i32_52 = arith.constant 1 : i32
    %74:3 = scf.for %arg17 = %c0_i32_50 to %73 step %c1_i32_52 iter_args(%arg18 = %70, %arg19 = %71, %arg20 = %72) -> (vector<8x1xf32>, vector<8x1xf32>, vector<8x16xf32>)  : i32 {
      %c0_i32_107 = arith.constant 0 : i32
      %177 = arith.addi %c0_i32_107, %arg17 : i32
      %178 = arith.index_cast %177 : i32 to index
      %c0_108 = arith.constant 0 : index
      %c48_109 = arith.constant 48 : index
      %179 = vector.load %arg15[%178, %c0_108, %c48_109] : memref<1x8x96xbf16, #tpu.memory_space<vmem>>, vector<1x8x16xbf16>
      %180 = vector.shape_cast %179 : vector<1x8x16xbf16> to vector<8x16xbf16>
      %181 = arith.index_cast %177 : i32 to index
      %c0_110 = arith.constant 0 : index
      %c80_111 = arith.constant 80 : index
      %182 = vector.load %arg15[%181, %c0_110, %c80_111] : memref<1x8x96xbf16, #tpu.memory_space<vmem>>, vector<1x8x16xbf16>
      %183 = vector.shape_cast %182 : vector<1x8x16xbf16> to vector<8x16xbf16>
      %cst_112 = arith.constant dense<0.000000e+00> : vector<8x8xf32>
      %184 = tpu.matmul %69, %180, %cst_112 {dimension_numbers = #tpu.dot_dimension_numbers<[1], [1], [0], [0], [0, 0, 1, 0], [], []>} : vector<8x16xbf16>, vector<8x16xbf16>, vector<8x8xf32> -> vector<8x8xf32>
      %cst_113 = arith.constant dense<0xFF800000> : vector<8xf32>
      %185 = vector.multi_reduction <maximumf>, %184, %cst_113 [1] : vector<8x8xf32> to vector<8xf32>
      %186 = vector.shape_cast %185 : vector<8xf32> to vector<8x1xf32>
      %187 = arith.maximumf %arg18, %186 : vector<8x1xf32>
      %188 = arith.subf %arg18, %187 : vector<8x1xf32>
      %189 = math.exp %188 : vector<8x1xf32>
      %190 = vector.broadcast %187 : vector<8x1xf32> to vector<8x8xf32>
      %191 = arith.subf %184, %190 : vector<8x8xf32>
      %192 = math.exp %191 : vector<8x8xf32>
      %193 = arith.mulf %189, %arg19 : vector<8x1xf32>
      %cst_114 = arith.constant dense<0.000000e+00> : vector<8xf32>
      %194 = vector.multi_reduction <add>, %192, %cst_114 [1] : vector<8x8xf32> to vector<8xf32>
      %195 = vector.shape_cast %194 : vector<8xf32> to vector<8x1xf32>
      %196 = arith.addf %193, %195 : vector<8x1xf32>
      %197 = vector.broadcast %189 : vector<8x1xf32> to vector<8x16xf32>
      %198 = arith.mulf %197, %arg20 : vector<8x16xf32>
      %199 = arith.truncf %192 : vector<8x8xf32> to vector<8x8xbf16>
      %cst_115 = arith.constant dense<0.000000e+00> : vector<8x16xf32>
      %200 = tpu.matmul %199, %183, %cst_115 {dimension_numbers = #tpu.dot_dimension_numbers<[1], [0], [0], [1], [0, 0, 1, 1], [], []>} : vector<8x8xbf16>, vector<8x16xbf16>, vector<8x16xf32> -> vector<8x16xf32>
      %201 = arith.addf %198, %200 : vector<8x16xf32>
      scf.yield %187, %196, %201 : vector<8x1xf32>, vector<8x1xf32>, vector<8x16xf32>
    }
    %c0_i32_53 = arith.constant 0 : i32
    %c0_54 = arith.constant 0 : index
    %c0_55 = arith.constant 0 : index
    %c48 = arith.constant 48 : index
    %75 = vector.load %arg15[%c0_54, %c0_55, %c48] : memref<1x8x96xbf16, #tpu.memory_space<vmem>>, vector<1x8x16xbf16>
    %76 = vector.shape_cast %75 : vector<1x8x16xbf16> to vector<8x16xbf16>
    %c0_56 = arith.constant 0 : index
    %c0_57 = arith.constant 0 : index
    %c80 = arith.constant 80 : index
    %77 = vector.load %arg15[%c0_56, %c0_57, %c80] : memref<1x8x96xbf16, #tpu.memory_space<vmem>>, vector<1x8x16xbf16>
    %78 = vector.shape_cast %77 : vector<1x8x16xbf16> to vector<8x16xbf16>
    %cst_58 = arith.constant dense<0.000000e+00> : vector<8x8xf32>
    %79 = tpu.matmul %69, %76, %cst_58 {dimension_numbers = #tpu.dot_dimension_numbers<[1], [1], [0], [0], [0, 0, 1, 0], [], []>} : vector<8x16xbf16>, vector<8x16xbf16>, vector<8x8xf32> -> vector<8x8xf32>
    %cst_59 = arith.constant -1.000000e+30 : f32
    %80 = vector.broadcast %cst_59 : f32 to vector<8x8xf32>
    %81 = arith.select %29, %79, %80 : vector<8x8xi1>, vector<8x8xf32>
    %cst_60 = arith.constant dense<0xFF800000> : vector<8xf32>
    %82 = vector.multi_reduction <maximumf>, %81, %cst_60 [1] : vector<8x8xf32> to vector<8xf32>
    %83 = vector.shape_cast %82 : vector<8xf32> to vector<8x1xf32>
    %84 = arith.maximumf %74#0, %83 : vector<8x1xf32>
    %85 = arith.subf %74#0, %84 : vector<8x1xf32>
    %86 = math.exp %85 : vector<8x1xf32>
    %87 = vector.broadcast %84 : vector<8x1xf32> to vector<8x8xf32>
    %88 = arith.subf %81, %87 : vector<8x8xf32>
    %89 = math.exp %88 : vector<8x8xf32>
    %90 = arith.mulf %86, %74#1 : vector<8x1xf32>
    %cst_61 = arith.constant dense<0.000000e+00> : vector<8xf32>
    %91 = vector.multi_reduction <add>, %89, %cst_61 [1] : vector<8x8xf32> to vector<8xf32>
    %92 = vector.shape_cast %91 : vector<8xf32> to vector<8x1xf32>
    %93 = arith.addf %90, %92 : vector<8x1xf32>
    %94 = vector.broadcast %86 : vector<8x1xf32> to vector<8x16xf32>
    %95 = arith.mulf %94, %74#2 : vector<8x16xf32>
    %96 = arith.truncf %89 : vector<8x8xf32> to vector<8x8xbf16>
    %cst_62 = arith.constant dense<0.000000e+00> : vector<8x16xf32>
    %97 = tpu.matmul %96, %78, %cst_62 {dimension_numbers = #tpu.dot_dimension_numbers<[1], [0], [0], [1], [0, 0, 1, 1], [], []>} : vector<8x8xbf16>, vector<8x16xbf16>, vector<8x16xf32> -> vector<8x16xf32>
    %98 = arith.addf %95, %97 : vector<8x16xf32>
    %99 = tpu.reciprocal %93 {approx = true} : vector<8x1xf32> -> vector<8x1xf32>
    %100 = vector.broadcast %99 : vector<8x1xf32> to vector<8x16xf32>
    %101 = arith.mulf %98, %100 : vector<8x16xf32>
    %102 = arith.truncf %101 : vector<8x16xf32> to vector<8x16xbf16>
    %c0_63 = arith.constant 0 : index
    %c0_64 = arith.constant 0 : index
    %c16_65 = arith.constant 16 : index
    %103 = vector.load %arg16[%c0_63, %c0_64, %c16_65] : memref<1x8x32xbf16, #tpu.memory_space<vmem>>, vector<1x8x16xbf16>
    %104 = vector.shape_cast %103 : vector<1x8x16xbf16> to vector<8x16xbf16>
    %105 = vector.shape_cast %102 : vector<8x16xbf16> to vector<1x8x16xbf16>
    tpu.vector_store %arg16[%c0_63, %c0_64, %c16_65], %105 {strides = array<i32>} : memref<1x8x32xbf16, #tpu.memory_space<vmem>>, vector<1x8x16xbf16>,
    %c0_66 = arith.constant 0 : index
    %c0_67 = arith.constant 0 : index
    %c0_68 = arith.constant 0 : index
    %106 = vector.load %arg16[%c0_66, %c0_67, %c0_68] : memref<1x8x32xbf16, #tpu.memory_space<vmem>>, vector<1x8x32xbf16>
    %107 = vector.shape_cast %106 : vector<1x8x32xbf16> to vector<8x32xbf16>
    %c0_69 = arith.constant 0 : index
    %c0_70 = arith.constant 0 : index
    %108 = vector.load %arg4[%c0_69, %c0_70] : memref<32x32xbf16, #tpu.memory_space<vmem>>, vector<32x32xbf16>
    %cst_71 = arith.constant dense<0.000000e+00> : vector<8x32xf32>
    %109 = tpu.matmul %107, %108, %cst_71 {dimension_numbers = #tpu.dot_dimension_numbers<[1], [0], [0], [1], [0, 0, 1, 1], [], []>} : vector<8x32xbf16>, vector<32x32xbf16>, vector<8x32xf32> -> vector<8x32xf32>
    %c0_72 = arith.constant 0 : index
    %c0_73 = arith.constant 0 : index
    %110 = vector.load %arg5[%c0_72, %c0_73] : memref<1x32xf32, #tpu.memory_space<vmem>>, vector<1x32xf32>
    %111 = vector.broadcast %110 : vector<1x32xf32> to vector<8x32xf32>
    %112 = arith.addf %109, %111 : vector<8x32xf32>
    %113 = arith.addf %1, %112 : vector<8x32xf32>
    %c0_74 = arith.constant 0 : index
    %c0_75 = arith.constant 0 : index
    %114 = vector.load %arg6[%c0_74, %c0_75] : memref<1x32xf32, #tpu.memory_space<vmem>>, vector<1x32xf32>
    %c0_76 = arith.constant 0 : index
    %c0_77 = arith.constant 0 : index
    %115 = vector.load %arg7[%c0_76, %c0_77] : memref<1x32xf32, #tpu.memory_space<vmem>>, vector<1x32xf32>
    %cst_78 = arith.constant dense<0.000000e+00> : vector<8xf32>
    %116 = vector.multi_reduction <add>, %113, %cst_78 [1] : vector<8x32xf32> to vector<8xf32>
    %117 = vector.shape_cast %116 : vector<8xf32> to vector<8x1xf32>
    %cst_79 = arith.constant 3.200000e+01 : f32
    %118 = vector.broadcast %cst_79 : f32 to vector<8x1xf32>
    %119 = arith.divf %117, %118 : vector<8x1xf32>
    %120 = vector.broadcast %119 : vector<8x1xf32> to vector<8x32xf32>
    %121 = arith.subf %113, %120 : vector<8x32xf32>
    %122 = arith.mulf %121, %121 : vector<8x32xf32>
    %cst_80 = arith.constant dense<0.000000e+00> : vector<8xf32>
    %123 = vector.multi_reduction <add>, %122, %cst_80 [1] : vector<8x32xf32> to vector<8xf32>
    %124 = vector.shape_cast %123 : vector<8xf32> to vector<8x1xf32>
    %cst_81 = arith.constant 3.200000e+01 : f32
    %125 = vector.broadcast %cst_81 : f32 to vector<8x1xf32>
    %126 = arith.divf %124, %125 : vector<8x1xf32>
    %cst_82 = arith.constant 9.99999974E-6 : f32
    %127 = vector.broadcast %cst_82 : f32 to vector<8x1xf32>
    %128 = arith.addf %126, %127 : vector<8x1xf32>
    %129 = math.rsqrt %128 : vector<8x1xf32>
    %130 = vector.broadcast %129 : vector<8x1xf32> to vector<8x32xf32>
    %131 = arith.mulf %121, %130 : vector<8x32xf32>
    %132 = vector.broadcast %114 : vector<1x32xf32> to vector<8x32xf32>
    %133 = arith.mulf %131, %132 : vector<8x32xf32>
    %134 = vector.broadcast %115 : vector<1x32xf32> to vector<8x32xf32>
    %135 = arith.addf %133, %134 : vector<8x32xf32>
    %136 = arith.truncf %135 : vector<8x32xf32> to vector<8x32xbf16>
    %cst_83 = arith.constant 0.000000e+00 : f32
    %137 = vector.broadcast %cst_83 : f32 to vector<8x32xf32>
    %c0_84 = arith.constant 0 : index
    %c0_85 = arith.constant 0 : index
    %138 = vector.load %arg8[%c0_84, %c0_85] : memref<32x128xbf16, #tpu.memory_space<vmem>>, vector<32x128xbf16>
    %cst_86 = arith.constant dense<0.000000e+00> : vector<8x128xf32>
    %139 = tpu.matmul %136, %138, %cst_86 {dimension_numbers = #tpu.dot_dimension_numbers<[1], [0], [0], [1], [0, 0, 1, 1], [], []>} : vector<8x32xbf16>, vector<32x128xbf16>, vector<8x128xf32> -> vector<8x128xf32>
    %c0_87 = arith.constant 0 : index
    %c0_88 = arith.constant 0 : index
    %140 = vector.load %arg9[%c0_87, %c0_88] : memref<1x128xf32, #tpu.memory_space<vmem>>, vector<1x128xf32>
    %141 = vector.broadcast %140 : vector<1x128xf32> to vector<8x128xf32>
    %142 = arith.addf %139, %141 : vector<8x128xf32>
    %cst_89 = arith.constant 0.000000e+00 : f32
    %143 = vector.broadcast %cst_89 : f32 to vector<8x128xf32>
    %144 = arith.maximumf %142, %143 : vector<8x128xf32>
    %145 = arith.truncf %144 : vector<8x128xf32> to vector<8x128xbf16>
    %c0_90 = arith.constant 0 : index
    %c0_91 = arith.constant 0 : index
    %146 = vector.load %arg10[%c0_90, %c0_91] : memref<128x32xbf16, #tpu.memory_space<vmem>>, vector<128x32xbf16>
    %cst_92 = arith.constant dense<0.000000e+00> : vector<8x32xf32>
    %147 = tpu.matmul %145, %146, %cst_92 {dimension_numbers = #tpu.dot_dimension_numbers<[1], [0], [0], [1], [0, 0, 1, 1], [], []>} : vector<8x128xbf16>, vector<128x32xbf16>, vector<8x32xf32> -> vector<8x32xf32>
    %148 = arith.addf %137, %147 : vector<8x32xf32>
    %c0_93 = arith.constant 0 : index
    %c0_94 = arith.constant 0 : index
    %149 = vector.load %arg11[%c0_93, %c0_94] : memref<1x32xf32, #tpu.memory_space<vmem>>, vector<1x32xf32>
    %150 = vector.broadcast %149 : vector<1x32xf32> to vector<8x32xf32>
    %151 = arith.addf %148, %150 : vector<8x32xf32>
    %152 = arith.addf %135, %151 : vector<8x32xf32>
    %c0_95 = arith.constant 0 : index
    %c0_96 = arith.constant 0 : index
    %153 = vector.load %arg12[%c0_95, %c0_96] : memref<1x32xf32, #tpu.memory_space<vmem>>, vector<1x32xf32>
    %c0_97 = arith.constant 0 : index
    %c0_98 = arith.constant 0 : index
    %154 = vector.load %arg13[%c0_97, %c0_98] : memref<1x32xf32, #tpu.memory_space<vmem>>, vector<1x32xf32>
    %cst_99 = arith.constant dense<0.000000e+00> : vector<8xf32>
    %155 = vector.multi_reduction <add>, %152, %cst_99 [1] : vector<8x32xf32> to vector<8xf32>
    %156 = vector.shape_cast %155 : vector<8xf32> to vector<8x1xf32>
    %cst_100 = arith.constant 3.200000e+01 : f32
    %157 = vector.broadcast %cst_100 : f32 to vector<8x1xf32>
    %158 = arith.divf %156, %157 : vector<8x1xf32>
    %159 = vector.broadcast %158 : vector<8x1xf32> to vector<8x32xf32>
    %160 = arith.subf %152, %159 : vector<8x32xf32>
    %161 = arith.mulf %160, %160 : vector<8x32xf32>
    %cst_101 = arith.constant dense<0.000000e+00> : vector<8xf32>
    %162 = vector.multi_reduction <add>, %161, %cst_101 [1] : vector<8x32xf32> to vector<8xf32>
    %163 = vector.shape_cast %162 : vector<8xf32> to vector<8x1xf32>
    %cst_102 = arith.constant 3.200000e+01 : f32
    %164 = vector.broadcast %cst_102 : f32 to vector<8x1xf32>
    %165 = arith.divf %163, %164 : vector<8x1xf32>
    %cst_103 = arith.constant 9.99999974E-6 : f32
    %166 = vector.broadcast %cst_103 : f32 to vector<8x1xf32>
    %167 = arith.addf %165, %166 : vector<8x1xf32>
    %168 = math.rsqrt %167 : vector<8x1xf32>
    %169 = vector.broadcast %168 : vector<8x1xf32> to vector<8x32xf32>
    %170 = arith.mulf %160, %169 : vector<8x32xf32>
    %171 = vector.broadcast %153 : vector<1x32xf32> to vector<8x32xf32>
    %172 = arith.mulf %170, %171 : vector<8x32xf32>
    %173 = vector.broadcast %154 : vector<1x32xf32> to vector<8x32xf32>
    %174 = arith.addf %172, %173 : vector<8x32xf32>
    %175 = vector.shape_cast %174 : vector<8x32xf32> to vector<1x8x32xf32>
    %c0_104 = arith.constant 0 : index
    %c0_105 = arith.constant 0 : index
    %c0_106 = arith.constant 0 : index
    %176 = vector.load %arg14[%c0_104, %c0_105, %c0_106] : memref<1x8x32xf32, #tpu.memory_space<vmem>>, vector<1x8x32xf32>
    tpu.vector_store %arg14[%c0_104, %c0_105, %c0_106], %175 {strides = array<i32>} : memref<1x8x32xf32, #tpu.memory_space<vmem>>, vector<1x8x32xf32>,
    return
  }
  func.func @transform_0(%arg0: i32) -> (i32, i32, i32) {
    %c0_i32 = arith.constant 0 : i32
    %c0_i32_0 = arith.constant 0 : i32
    %c0_i32_1 = arith.constant 0 : i32
    return %arg0, %c0_i32, %c0_i32_0 : i32, i32, i32
  }
  func.func @transform_1(%arg0: i32) -> (i32, i32) {
    %c0_i32 = arith.constant 0 : i32
    %c0_i32_0 = arith.constant 0 : i32
    %c0_i32_1 = arith.constant 0 : i32
    return %c0_i32, %c0_i32_0 : i32, i32
  }
  func.func @transform_2(%arg0: i32) -> (i32, i32) {
    %c0_i32 = arith.constant 0 : i32
    %c0_i32_0 = arith.constant 0 : i32
    %c0_i32_1 = arith.constant 0 : i32
    return %c0_i32, %c0_i32_0 : i32, i32
  }
  func.func @transform_3(%arg0: i32) -> (i32, i32) {
    %c0_i32 = arith.constant 0 : i32
    %c0_i32_0 = arith.constant 0 : i32
    %c0_i32_1 = arith.constant 0 : i32
    return %c0_i32, %c0_i32_0 : i32, i32
  }
  func.func @transform_4(%arg0: i32) -> (i32, i32) {
    %c0_i32 = arith.constant 0 : i32
    %c0_i32_0 = arith.constant 0 : i32
    %c0_i32_1 = arith.constant 0 : i32
    return %c0_i32, %c0_i32_0 : i32, i32
  }
  func.func @transform_5(%arg0: i32) -> (i32, i32) {
    %c0_i32 = arith.constant 0 : i32
    %c0_i32_0 = arith.constant 0 : i32
    %c0_i32_1 = arith.constant 0 : i32
    return %c0_i32, %c0_i32_0 : i32, i32
  }
  func.func @transform_6(%arg0: i32) -> (i32, i32) {
    %c0_i32 = arith.constant 0 : i32
    %c0_i32_0 = arith.constant 0 : i32
    %c0_i32_1 = arith.constant 0 : i32
    return %c0_i32, %c0_i32_0 : i32, i32
  }
  func.func @transform_7(%arg0: i32) -> (i32, i32) {
    %c0_i32 = arith.constant 0 : i32
    %c0_i32_0 = arith.constant 0 : i32
    %c0_i32_1 = arith.constant 0 : i32
    return %c0_i32, %c0_i32_0 : i32, i32
  }
  func.func @transform_8(%arg0: i32) -> (i32, i32) {
    %c0_i32 = arith.constant 0 : i32
    %c0_i32_0 = arith.constant 0 : i32
    %c0_i32_1 = arith.constant 0 : i32
    return %c0_i32, %c0_i32_0 : i32, i32
  }
  func.func @transform_9(%arg0: i32) -> (i32, i32) {
    %c0_i32 = arith.constant 0 : i32
    %c0_i32_0 = arith.constant 0 : i32
    %c0_i32_1 = arith.constant 0 : i32
    return %c0_i32, %c0_i32_0 : i32, i32
  }
  func.func @transform_10(%arg0: i32) -> (i32, i32) {
    %c0_i32 = arith.constant 0 : i32
    %c0_i32_0 = arith.constant 0 : i32
    %c0_i32_1 = arith.constant 0 : i32
    return %c0_i32, %c0_i32_0 : i32, i32
  }
  func.func @transform_11(%arg0: i32) -> (i32, i32) {
    %c0_i32 = arith.constant 0 : i32
    %c0_i32_0 = arith.constant 0 : i32
    %c0_i32_1 = arith.constant 0 : i32
    return %c0_i32, %c0_i32_0 : i32, i32
  }
  func.func @transform_12(%arg0: i32) -> (i32, i32) {
    %c0_i32 = arith.constant 0 : i32
    %c0_i32_0 = arith.constant 0 : i32
    %c0_i32_1 = arith.constant 0 : i32
    return %c0_i32, %c0_i32_0 : i32, i32
  }
  func.func @transform_13(%arg0: i32) -> (i32, i32, i32) {
    %c0_i32 = arith.constant 0 : i32
    %c0_i32_0 = arith.constant 0 : i32
    %c0_i32_1 = arith.constant 0 : i32
    return %arg0, %c0_i32, %c0_i32_0 : i32, i32, i32
  }
}

</mosaic_0001>

<llo_original>
// kernel: tpu_custom_call.1
$region0: #{tpu_custom_call.1}
  #allocation0 [shape = 'u32[]', space=smem, size = 0x4, offset = 0x4, fixed_abs, tag = 'smem constant byte address 0x4 - core index']
  #allocation1 [shape = 'u32[144,128]{1,0:T(1,128)}', space=vmem, size = 0x12000, scoped, tag = 'internal scratch']
  #allocation2 [shape = 'bf16[1,8,96]{2,1,0:T(8,128)(2,1)}', space=vmem, size = 0x800, scoped, tag = 'scratch operand']
  #allocation3 [shape = 'bf16[1,8,32]{2,1,0:T(8,128)(2,1)}', space=vmem, size = 0x800, scoped, tag = 'scratch operand']
  %s0 = inlined_call_operand.vmem [shape: f32[2,8,32], index: 0, kind: input, shape index: {}]
  %s1 = inlined_call_operand.vmem [shape: bf16[32,96], index: 1, kind: input, shape index: {}]
  %s2 = inlined_call_operand.vmem [shape: f32[1,96], index: 2, kind: input, shape index: {}]
  %s3 = inlined_call_operand.vmem [shape: bf16[32,32], index: 3, kind: input, shape index: {}]
  %s4 = inlined_call_operand.vmem [shape: f32[1,32], index: 4, kind: input, shape index: {}]
  %s5 = inlined_call_operand.vmem [shape: f32[1,32], index: 5, kind: input, shape index: {}]
  %s6 = inlined_call_operand.vmem [shape: f32[1,32], index: 6, kind: input, shape index: {}]
  %s7 = inlined_call_operand.vmem [shape: bf16[32,128], index: 7, kind: input, shape index: {}]
  %s8 = inlined_call_operand.vmem [shape: f32[1,128], index: 8, kind: input, shape index: {}]
  %s9 = inlined_call_operand.vmem [shape: bf16[128,32], index: 9, kind: input, shape index: {}]
  %s10 = inlined_call_operand.vmem [shape: f32[1,32], index: 10, kind: input, shape index: {}]
  %s11 = inlined_call_operand.vmem [shape: f32[1,32], index: 11, kind: input, shape index: {}]
  %s12 = inlined_call_operand.vmem [shape: f32[1,32], index: 12, kind: input, shape index: {}]
  %s13 = inlined_call_operand.hbm [shape: f32[2,8,32], index: 13, kind: output, shape index: {}]
  %s14 = sld [smem:[#allocation0]]
  $region85: #{tpu_custom_call.1} parent=0
    _
  %s16 = ssub.s32 1, %s14
  %s17 = scalar_select 0, %s16, %s14
  $region1: #{tpu_custom_call.1} parent=0
    #allocation4 [shape = 'u8[8192]{0}', space=vmem, size = 0x2000, scoped, tag = 'output window, operand 0']
    #allocation5 [shape = 's32[2]{0}', space=sflag, size = 0x8, scoped, tag = 'scoped memory for tpu_custom_call.1']
    %18 = vsyncpa [#allocation5], 0
    %s19 = scalar_lea.sflag [#allocation5], 1
    %20 = vsyncpa %s19, 0
    loop: start=0, step=1, limit=4
    $region2: #{tpu_custom_call.1} parent=1 // loop_pre_header
      _
    $region3: #{tpu_custom_call.1} parent=1 // loop_header
      %s22 = sphi 0, %s26
      %p23 = scmp.ge.s32.totalorder %s22, 4
      %s32 = sphi 0, %s34
      %s35 = sphi 0, %s32
      %s36 = sphi 0, %s35
      %s52 = sphi 0, %s36
      %s56 = sphi 0, %s56
      %s58 = sphi 0, %s56
      %s59 = sphi 0, %s58
      %s73 = sphi 0, %s59
      %s77 = sphi 0, %s77
      %s79 = sphi 0, %s77
      %s80 = sphi 0, %s79
      %s94 = sphi 0, %s80
      %s98 = sphi 0, %s98
      %s100 = sphi 0, %s98
      %s101 = sphi 0, %s100
      %s115 = sphi 0, %s101
      %s119 = sphi 0, %s119
      %s121 = sphi 0, %s119
      %s122 = sphi 0, %s121
      %s136 = sphi 0, %s122
      %s140 = sphi 0, %s140
      %s142 = sphi 0, %s140
      %s143 = sphi 0, %s142
      %s157 = sphi 0, %s143
      %s161 = sphi 0, %s161
      %s163 = sphi 0, %s161
      %s164 = sphi 0, %s163
      %s178 = sphi 0, %s164
      %s182 = sphi 0, %s182
      %s184 = sphi 0, %s182
      %s185 = sphi 0, %s184
      %s199 = sphi 0, %s185
      %s203 = sphi 0, %s203
      %s205 = sphi 0, %s203
      %s206 = sphi 0, %s205
      %s220 = sphi 0, %s206
      %s224 = sphi 0, %s224
      %s226 = sphi 0, %s224
      %s227 = sphi 0, %s226
      %s241 = sphi 0, %s227
      %s245 = sphi 0, %s245
      %s247 = sphi 0, %s245
      %s248 = sphi 0, %s247
      %s262 = sphi 0, %s248
      %s266 = sphi 0, %s266
      %s268 = sphi 0, %s266
      %s269 = sphi 0, %s268
      %s283 = sphi 0, %s269
      %s287 = sphi 0, %s287
      %s289 = sphi 0, %s287
      %s290 = sphi 0, %s289
      %s304 = sphi 0, %s290
      %s310 = sphi 0, %s312
      %s313 = sphi 0, %s310
      %s314 = sphi 0, %s313
      %s330 = sphi 0, %s314
    $region4: #{tpu_custom_call.1} parent=1 // loop_header_branch
      %25 = sbr.rel (%p23) target = $region8
    $region5: #{tpu_custom_call.1} parent=1 // loop_body
      %s27 = ssub.s32 %s22, 1
      %s28 = ssub.s32 %s22, 2
      %s29 = sadd.s32 %s22, 1
      %s30 = ssub.s32 %s22, %s29
      %p31 = scmp.eq.s32.totalorder %s30, 0
      %s33 = sadd.s32 %s32, 1
      %s34 = scalar_select %p31, %s32, %s33
      %p37 = pneg %p31
      %p38 = scmp.eq.s32.totalorder %s22, 1
      %p39 = por %p37, %p38
      %p40 = scmp.ne.s32.totalorder %s32, %s35
      %p41 = scmp.eq.s32.totalorder %s22, 0
      %p42 = por %p40, %p41
      %p43 = scmp.ne.s32.totalorder %s32, %s35
      %p44 = scmp.eq.s32.totalorder %s27, 1
      %p45 = por %p43, %p44
      %p46 = scmp.ne.s32.totalorder %s35, %s36
      %p47 = scmp.eq.s32.totalorder %s27, 0
      %p48 = por %p46, %p47
      %p49 = scmp.ne.s32.totalorder %s35, %s36
      %p50 = scmp.eq.s32.totalorder %s28, 1
      %p51 = por %p49, %p50
      %p53 = scmp.ne.s32.totalorder %s36, %s52
      %p54 = scmp.eq.s32.totalorder %s28, 0
      %p55 = por %p53, %p54
      %s57 = sadd.s32 %s56, 1
      %p60 = scmp.eq.s32.totalorder %s22, 1
      %p61 = scmp.ne.s32.totalorder %s56, %s58
      %p62 = scmp.eq.s32.totalorder %s22, 0
      %p63 = por %p61, %p62
      %p64 = scmp.ne.s32.totalorder %s56, %s58
      %p65 = scmp.eq.s32.totalorder %s27, 1
      %p66 = por %p64, %p65
      %p67 = scmp.ne.s32.totalorder %s58, %s59
      %p68 = scmp.eq.s32.totalorder %s27, 0
      %p69 = por %p67, %p68
      %p70 = scmp.ne.s32.totalorder %s58, %s59
      %p71 = scmp.eq.s32.totalorder %s28, 1
      %p72 = por %p70, %p71
      %p74 = scmp.ne.s32.totalorder %s59, %s73
      %p75 = scmp.eq.s32.totalorder %s28, 0
      %p76 = por %p74, %p75
      %s78 = sadd.s32 %s77, 1
      %p81 = scmp.eq.s32.totalorder %s22, 1
      %p82 = scmp.ne.s32.totalorder %s77, %s79
      %p83 = scmp.eq.s32.totalorder %s22, 0
      %p84 = por %p82, %p83
      %p85 = scmp.ne.s32.totalorder %s77, %s79
      %p86 = scmp.eq.s32.totalorder %s27, 1
      %p87 = por %p85, %p86
      %p88 = scmp.ne.s32.totalorder %s79, %s80
      %p89 = scmp.eq.s32.totalorder %s27, 0
      %p90 = por %p88, %p89
      %p91 = scmp.ne.s32.totalorder %s79, %s80
      %p92 = scmp.eq.s32.totalorder %s28, 1
      %p93 = por %p91, %p92
      %p95 = scmp.ne.s32.totalorder %s80, %s94
      %p96 = scmp.eq.s32.totalorder %s28, 0
      %p97 = por %p95, %p96
      %s99 = sadd.s32 %s98, 1
      %p102 = scmp.eq.s32.totalorder %s22, 1
      %p103 = scmp.ne.s32.totalorder %s98, %s100
      %p104 = scmp.eq.s32.totalorder %s22, 0
      %p105 = por %p103, %p104
      %p106 = scmp.ne.s32.totalorder %s98, %s100
      %p107 = scmp.eq.s32.totalorder %s27, 1
      %p108 = por %p106, %p107
      %p109 = scmp.ne.s32.totalorder %s100, %s101
      %p110 = scmp.eq.s32.totalorder %s27, 0
      %p111 = por %p109, %p110
      %p112 = scmp.ne.s32.totalorder %s100, %s101
      %p113 = scmp.eq.s32.totalorder %s28, 1
      %p114 = por %p112, %p113
      %p116 = scmp.ne.s32.totalorder %s101, %s115
      %p117 = scmp.eq.s32.totalorder %s28, 0
      %p118 = por %p116, %p117
      %s120 = sadd.s32 %s119, 1
      %p123 = scmp.eq.s32.totalorder %s22, 1
      %p124 = scmp.ne.s32.totalorder %s119, %s121
      %p125 = scmp.eq.s32.totalorder %s22, 0
      %p126 = por %p124, %p125
      %p127 = scmp.ne.s32.totalorder %s119, %s121
      %p128 = scmp.eq.s32.totalorder %s27, 1
      %p129 = por %p127, %p128
      %p130 = scmp.ne.s32.totalorder %s121, %s122
      %p131 = scmp.eq.s32.totalorder %s27, 0
      %p132 = por %p130, %p131
      %p133 = scmp.ne.s32.totalorder %s121, %s122
      %p134 = scmp.eq.s32.totalorder %s28, 1
      %p135 = por %p133, %p134
      %p137 = scmp.ne.s32.totalorder %s122, %s136
      %p138 = scmp.eq.s32.totalorder %s28, 0
      %p139 = por %p137, %p138
      %s141 = sadd.s32 %s140, 1
      %p144 = scmp.eq.s32.totalorder %s22, 1
      %p145 = scmp.ne.s32.totalorder %s140, %s142
      %p146 = scmp.eq.s32.totalorder %s22, 0
      %p147 = por %p145, %p146
      %p148 = scmp.ne.s32.totalorder %s140, %s142
      %p149 = scmp.eq.s32.totalorder %s27, 1
      %p150 = por %p148, %p149
      %p151 = scmp.ne.s32.totalorder %s142, %s143
      %p152 = scmp.eq.s32.totalorder %s27, 0
      %p153 = por %p151, %p152
      %p154 = scmp.ne.s32.totalorder %s142, %s143
      %p155 = scmp.eq.s32.totalorder %s28, 1
      %p156 = por %p154, %p155
      %p158 = scmp.ne.s32.totalorder %s143, %s157
      %p159 = scmp.eq.s32.totalorder %s28, 0
      %p160 = por %p158, %p159
      %s162 = sadd.s32 %s161, 1
      %p165 = scmp.eq.s32.totalorder %s22, 1
      %p166 = scmp.ne.s32.totalorder %s161, %s163
      %p167 = scmp.eq.s32.totalorder %s22, 0
      %p168 = por %p166, %p167
      %p169 = scmp.ne.s32.totalorder %s161, %s163
      %p170 = scmp.eq.s32.totalorder %s27, 1
      %p171 = por %p169, %p170
      %p172 = scmp.ne.s32.totalorder %s163, %s164
      %p173 = scmp.eq.s32.totalorder %s27, 0
      %p174 = por %p172, %p173
      %p175 = scmp.ne.s32.totalorder %s163, %s164
      %p176 = scmp.eq.s32.totalorder %s28, 1
      %p177 = por %p175, %p176
      %p179 = scmp.ne.s32.totalorder %s164, %s178
      %p180 = scmp.eq.s32.totalorder %s28, 0
      %p181 = por %p179, %p180
      %s183 = sadd.s32 %s182, 1
      %p186 = scmp.eq.s32.totalorder %s22, 1
      %p187 = scmp.ne.s32.totalorder %s182, %s184
      %p188 = scmp.eq.s32.totalorder %s22, 0
      %p189 = por %p187, %p188
      %p190 = scmp.ne.s32.totalorder %s182, %s184
      %p191 = scmp.eq.s32.totalorder %s27, 1
      %p192 = por %p190, %p191
      %p193 = scmp.ne.s32.totalorder %s184, %s185
      %p194 = scmp.eq.s32.totalorder %s27, 0
      %p195 = por %p193, %p194
      %p196 = scmp.ne.s32.totalorder %s184, %s185
      %p197 = scmp.eq.s32.totalorder %s28, 1
      %p198 = por %p196, %p197
      %p200 = scmp.ne.s32.totalorder %s185, %s199
      %p201 = scmp.eq.s32.totalorder %s28, 0
      %p202 = por %p200, %p201
      %s204 = sadd.s32 %s203, 1
      %p207 = scmp.eq.s32.totalorder %s22, 1
      %p208 = scmp.ne.s32.totalorder %s203, %s205
      %p209 = scmp.eq.s32.totalorder %s22, 0
      %p210 = por %p208, %p209
      %p211 = scmp.ne.s32.totalorder %s203, %s205
      %p212 = scmp.eq.s32.totalorder %s27, 1
      %p213 = por %p211, %p212
      %p214 = scmp.ne.s32.totalorder %s205, %s206
      %p215 = scmp.eq.s32.totalorder %s27, 0
      %p216 = por %p214, %p215
      %p217 = scmp.ne.s32.totalorder %s205, %s206
      %p218 = scmp.eq.s32.totalorder %s28, 1
      %p219 = por %p217, %p218
      %p221 = scmp.ne.s32.totalorder %s206, %s220
      %p222 = scmp.eq.s32.totalorder %s28, 0
      %p223 = por %p221, %p222
      %s225 = sadd.s32 %s224, 1
      %p228 = scmp.eq.s32.totalorder %s22, 1
      %p229 = scmp.ne.s32.totalorder %s224, %s226
      %p230 = scmp.eq.s32.totalorder %s22, 0
      %p231 = por %p229, %p230
      %p232 = scmp.ne.s32.totalorder %s224, %s226
      %p233 = scmp.eq.s32.totalorder %s27, 1
      %p234 = por %p232, %p233
      %p235 = scmp.ne.s32.totalorder %s226, %s227
      %p236 = scmp.eq.s32.totalorder %s27, 0
      %p237 = por %p235, %p236
      %p238 = scmp.ne.s32.totalorder %s226, %s227
      %p239 = scmp.eq.s32.totalorder %s28, 1
      %p240 = por %p238, %p239
      %p242 = scmp.ne.s32.totalorder %s227, %s241
      %p243 = scmp.eq.s32.totalorder %s28, 0
      %p244 = por %p242, %p243
      %s246 = sadd.s32 %s245, 1
      %p249 = scmp.eq.s32.totalorder %s22, 1
      %p250 = scmp.ne.s32.totalorder %s245, %s247
      %p251 = scmp.eq.s32.totalorder %s22, 0
      %p252 = por %p250, %p251
      %p253 = scmp.ne.s32.totalorder %s245, %s247
      %p254 = scmp.eq.s32.totalorder %s27, 1
      %p255 = por %p253, %p254
      %p256 = scmp.ne.s32.totalorder %s247, %s248
      %p257 = scmp.eq.s32.totalorder %s27, 0
      %p258 = por %p256, %p257
      %p259 = scmp.ne.s32.totalorder %s247, %s248
      %p260 = scmp.eq.s32.totalorder %s28, 1
      %p261 = por %p259, %p260
      %p263 = scmp.ne.s32.totalorder %s248, %s262
      %p264 = scmp.eq.s32.totalorder %s28, 0
      %p265 = por %p263, %p264
      %s267 = sadd.s32 %s266, 1
      %p270 = scmp.eq.s32.totalorder %s22, 1
      %p271 = scmp.ne.s32.totalorder %s266, %s268
      %p272 = scmp.eq.s32.totalorder %s22, 0
      %p273 = por %p271, %p272
      %p274 = scmp.ne.s32.totalorder %s266, %s268
      %p275 = scmp.eq.s32.totalorder %s27, 1
      %p276 = por %p274, %p275
      %p277 = scmp.ne.s32.totalorder %s268, %s269
      %p278 = scmp.eq.s32.totalorder %s27, 0
      %p279 = por %p277, %p278
      %p280 = scmp.ne.s32.totalorder %s268, %s269
      %p281 = scmp.eq.s32.totalorder %s28, 1
      %p282 = por %p280, %p281
      %p284 = scmp.ne.s32.totalorder %s269, %s283
      %p285 = scmp.eq.s32.totalorder %s28, 0
      %p286 = por %p284, %p285
      %s288 = sadd.s32 %s287, 1
      %p291 = scmp.eq.s32.totalorder %s22, 1
      %p292 = scmp.ne.s32.totalorder %s287, %s289
      %p293 = scmp.eq.s32.totalorder %s22, 0
      %p294 = por %p292, %p293
      %p295 = scmp.ne.s32.totalorder %s287, %s289
      %p296 = scmp.eq.s32.totalorder %s27, 1
      %p297 = por %p295, %p296
      %p298 = scmp.ne.s32.totalorder %s289, %s290
      %p299 = scmp.eq.s32.totalorder %s27, 0
      %p300 = por %p298, %p299
      %p301 = scmp.ne.s32.totalorder %s289, %s290
      %p302 = scmp.eq.s32.totalorder %s28, 1
      %p303 = por %p301, %p302
      %p305 = scmp.ne.s32.totalorder %s290, %s304
      %p306 = scmp.eq.s32.totalorder %s28, 0
      %p307 = por %p305, %p306
      %s308 = ssub.s32 %s22, %s29
      %p309 = scmp.eq.s32.totalorder %s308, 0
      %s311 = sadd.s32 %s310, 1
      %s312 = scalar_select %p309, %s310, %s311
      %p315 = pneg %p309
      %p316 = scmp.eq.s32.totalorder %s22, 1
      %p317 = por %p315, %p316
      %p318 = scmp.ne.s32.totalorder %s310, %s313
      %p319 = scmp.eq.s32.totalorder %s22, 0
      %p320 = por %p318, %p319
      %p321 = scmp.ne.s32.totalorder %s310, %s313
      %p322 = scmp.eq.s32.totalorder %s27, 1
      %p323 = por %p321, %p322
      %p324 = scmp.ne.s32.totalorder %s313, %s314
      %p325 = scmp.eq.s32.totalorder %s27, 0
      %p326 = por %p324, %p325
      %p327 = scmp.ne.s32.totalorder %s313, %s314
      %p328 = scmp.eq.s32.totalorder %s28, 1
      %p329 = por %p327, %p328
      %p331 = scmp.ne.s32.totalorder %s314, %s330
      %p332 = scmp.eq.s32.totalorder %s28, 0
      %p333 = por %p331, %p332
      %p334 = scmp.le.s32.totalorder 1, %s22
      %p335 = scmp.lt.s32.totalorder %s22, 3
      %p336 = pnand %p334, %p335
      %p337 = pneg %p336
      // Predicated region
      $region9: #{tpu_custom_call.1} parent=5 // pred_check
        _
      $region10: #{tpu_custom_call.1} parent=5 // pred_check_branch
        %339 = sbr.rel (%p336) target = $region12
      $region11: #{tpu_custom_call.1} parent=5 // pred_region
        %s340 = ssub.s32 %s22, 1
        // Predicated region
        $region13: #{tpu_custom_call.1} parent=11 // pred_check
          %p341 = pneg %p69
        $region14: #{tpu_custom_call.1} parent=11 // pred_check_branch
          %343 = sbr.rel (%p341) target = $region16
        $region15: #{tpu_custom_call.1} parent=11 // pred_region
          _
        $region16: #{tpu_custom_call.1} parent=11 // pred_fallthru
          _
        // Predicated region
        $region17: #{tpu_custom_call.1} parent=11 // pred_check
          %p344 = pneg %p90
        $region18: #{tpu_custom_call.1} parent=11 // pred_check_branch
          %346 = sbr.rel (%p344) target = $region20
        $region19: #{tpu_custom_call.1} parent=11 // pred_region
          _
        $region20: #{tpu_custom_call.1} parent=11 // pred_fallthru
          _
        // Predicated region
        $region21: #{tpu_custom_call.1} parent=11 // pred_check
          %p347 = pneg %p111
        $region22: #{tpu_custom_call.1} parent=11 // pred_check_branch
          %349 = sbr.rel (%p347) target = $region24
        $region23: #{tpu_custom_call.1} parent=11 // pred_region
          _
        $region24: #{tpu_custom_call.1} parent=11 // pred_fallthru
          _
        // Predicated region
        $region25: #{tpu_custom_call.1} parent=11 // pred_check
          %p350 = pneg %p132
        $region26: #{tpu_custom_call.1} parent=11 // pred_check_branch
          %352 = sbr.rel (%p350) target = $region28
        $region27: #{tpu_custom_call.1} parent=11 // pred_region
          _
        $region28: #{tpu_custom_call.1} parent=11 // pred_fallthru
          _
        // Predicated region
        $region29: #{tpu_custom_call.1} parent=11 // pred_check
          %p353 = pneg %p153
        $region30: #{tpu_custom_call.1} parent=11 // pred_check_branch
          %355 = sbr.rel (%p353) target = $region32
        $region31: #{tpu_custom_call.1} parent=11 // pred_region
          _
        $region32: #{tpu_custom_call.1} parent=11 // pred_fallthru
          _
        // Predicated region
        $region33: #{tpu_custom_call.1} parent=11 // pred_check
          %p356 = pneg %p174
        $region34: #{tpu_custom_call.1} parent=11 // pred_check_branch
          %358 = sbr.rel (%p356) target = $region36
        $region35: #{tpu_custom_call.1} parent=11 // pred_region
          _
        $region36: #{tpu_custom_call.1} parent=11 // pred_fallthru
          _
        // Predicated region
        $region37: #{tpu_custom_call.1} parent=11 // pred_check
          %p359 = pneg %p195
        $region38: #{tpu_custom_call.1} parent=11 // pred_check_branch
          %361 = sbr.rel (%p359) target = $region40
        $region39: #{tpu_custom_call.1} parent=11 // pred_region
          _
        $region40: #{tpu_custom_call.1} parent=11 // pred_fallthru
          _
        // Predicated region
        $region41: #{tpu_custom_call.1} parent=11 // pred_check
          %p362 = pneg %p216
        $region42: #{tpu_custom_call.1} parent=11 // pred_check_branch
          %364 = sbr.rel (%p362) target = $region44
        $region43: #{tpu_custom_call.1} parent=11 // pred_region
          _
        $region44: #{tpu_custom_call.1} parent=11 // pred_fallthru
          _
        // Predicated region
        $region45: #{tpu_custom_call.1} parent=11 // pred_check
          %p365 = pneg %p237
        $region46: #{tpu_custom_call.1} parent=11 // pred_check_branch
          %367 = sbr.rel (%p365) target = $region48
        $region47: #{tpu_custom_call.1} parent=11 // pred_region
          _
        $region48: #{tpu_custom_call.1} parent=11 // pred_fallthru
          _
        // Predicated region
        $region49: #{tpu_custom_call.1} parent=11 // pred_check
          %p368 = pneg %p258
        $region50: #{tpu_custom_call.1} parent=11 // pred_check_branch
          %370 = sbr.rel (%p368) target = $region52
        $region51: #{tpu_custom_call.1} parent=11 // pred_region
          _
        $region52: #{tpu_custom_call.1} parent=11 // pred_fallthru
          _
        // Predicated region
        $region53: #{tpu_custom_call.1} parent=11 // pred_check
          %p371 = pneg %p279
        $region54: #{tpu_custom_call.1} parent=11 // pred_check_branch
          %373 = sbr.rel (%p371) target = $region56
        $region55: #{tpu_custom_call.1} parent=11 // pred_region
          _
        $region56: #{tpu_custom_call.1} parent=11 // pred_fallthru
          _
        // Predicated region
        $region57: #{tpu_custom_call.1} parent=11 // pred_check
          %p374 = pneg %p300
        $region58: #{tpu_custom_call.1} parent=11 // pred_check_branch
          %376 = sbr.rel (%p374) target = $region60
        $region59: #{tpu_custom_call.1} parent=11 // pred_region
          _
        $region60: #{tpu_custom_call.1} parent=11 // pred_fallthru
          _
      $region12: #{tpu_custom_call.1} parent=5 // pred_fallthru
        _
      %p377 = scmp.lt.s32.totalorder %s22, 2
      // Predicated region
      $region61: #{tpu_custom_call.1} parent=5 // pred_check
        %p378 = pneg %p377
      $region62: #{tpu_custom_call.1} parent=5 // pred_check_branch
        %380 = sbr.rel (%p378) target = $region64
      $region63: #{tpu_custom_call.1} parent=5 // pred_region
        // Predicated region
        $region65: #{tpu_custom_call.1} parent=63 // pred_check
          %p381 = pneg %p42
        $region66: #{tpu_custom_call.1} parent=63 // pred_check_branch
          %383 = sbr.rel (%p381) target = $region68
        $region67: #{tpu_custom_call.1} parent=63 // pred_region
          %p384 = scmp.lt.s32.totalorder %s22, 1
          %s385 = scalar_select %p384, %s22, 1
          %s386 = smul.addr %s385, 8
          %s387 = scalar_lea.vmem %s0, %s386
        $region68: #{tpu_custom_call.1} parent=63 // pred_fallthru
          _
      $region64: #{tpu_custom_call.1} parent=5 // pred_fallthru
        _
      %p388 = scmp.le.s32.totalorder 1, %s22
      %p389 = scmp.lt.s32.totalorder %s22, 3
      %p390 = pnand %p388, %p389
      %p391 = pneg %p390
      // Predicated region
      $region69: #{tpu_custom_call.1} parent=5 // pred_check
        _
      $region70: #{tpu_custom_call.1} parent=5 // pred_check_branch
        %393 = sbr.rel (%p390) target = $region72
      $region71: #{tpu_custom_call.1} parent=5 // pred_region
        %s394 = ssub.s32 %s22, 1
        %p395 = scmp.lt.s32.totalorder %s27, 1
        %s396 = scalar_select %p395, %s27, 1
        %s397 = smul.addr %s396, 8
        %s398 = scalar_lea.vmem %s0, %s397
        %p399 = pneg %p48
        %p400 = pneg %p45
        %p401 = pneg %p69
        %p402 = pneg %p66
        %p403 = pneg %p90
        %p404 = pneg %p87
        %p405 = pneg %p111
        %p406 = pneg %p108
        %p407 = pneg %p132
        %p408 = pneg %p129
        %p409 = pneg %p153
        %p410 = pneg %p150
        %p411 = pneg %p174
        %p412 = pneg %p171
        %p413 = pneg %p195
        %p414 = pneg %p192
        %p415 = pneg %p216
        %p416 = pneg %p213
        %p417 = pneg %p237
        %p418 = pneg %p234
        %p419 = pneg %p258
        %p420 = pneg %p255
        %p421 = pneg %p279
        %p422 = pneg %p276
        %p423 = pneg %p300
        %p424 = pneg %p297
        %p425 = pneg %p326
        %p426 = pneg %p323
        %s427 = sand.u32 %s313, 1
        %s428 = scalar_lea.sflag [#allocation5], %s427
        %s429 = sand.u32 %s313, 1
        %s430 = smul.addr %s429, 8
        %s431 = scalar_lea.vmem [#allocation4], %s430
        %p432 = scmp.lt.s32.totalorder %s27, 1
        %s433 = scalar_select %p432, %s27, 1
        %s434 = smul.addr %s433, 8
        %s435 = scalar_lea.vmem %s0, %s434
        %v437 = vld [vmem:[%s435] sm:$0xff]
        %v438 = vpack.c.bf16 %v437, %v437
        %v439 = vld [vmem:[%s1] sm:$0xf]
        %v440 = vld [vmem:[%s1 + $0x4] sm:$0xf]
        %v441 = vld [vmem:[%s1 + $0x8] sm:$0xf]
        %v442 = vld [vmem:[%s1 + $0xc] sm:$0xf]
        %v443 = vld [vmem:[%s2] sm:$0x1]
        %v445 = vlaneseq
        %v446 = vshrl.u32 %v445, 7
        %v447 = vsub.s32 0, %v446
        %v448 = vrot.slane %v443, %v447
        %v454 = vunpack.c.l.b16 %v439
        %v455 = vunpack.c.l.b16 %v440
        %v456 = vunpack.c.l.b16 %v441
        %v457 = vunpack.c.l.b16 %v442
        %v458 = vpack.c.b16 %v455, %v454
        %v459 = vpack.c.b16 %v457, %v456
        %vm462 = vcmask 261120
        %v464 = vsel %vm462, %v438, 0
        %466 = vmatprep.subr.bf16.mxu0 0
        %467 = vmatpush1.bf16.msra.mxu0 %v458
        %468 = vmatprep.subr.bf16.mxu0 0
        %469 = vmatpush1.bf16.msra.mxu0 %v459
        %470 = vmatprep.subr.bf16.mxu0 0
        %471 = vmatpush1.bf16.msra.mxu0 0
        %472 = vmatprep.subr.bf16.mxu0 0
        %473 = vmatpush1.bf16.msra.mxu0 0
        %474 = vmatprep.subr.bf16.mxu0 0
        %475 = vmatpush1.bf16.msra.mxu0 0
        %476 = vmatprep.subr.bf16.mxu0 0
        %477 = vmatpush1.bf16.msra.mxu0 0
        %478 = vmatprep.subr.bf16.mxu0 0
        %479 = vmatpush1.bf16.msra.mxu0 0
        %480 = vmatprep.subr.bf16.mxu0 0
        %481 = vmatpush1.bf16.msra.mxu0 0
        %482 = vmatprep.subr.bf16.mxu0 0
        %483 = vmatpush1.bf16.msra.mxu0 0
        %484 = vmatprep.subr.bf16.mxu0 0
        %485 = vmatpush1.bf16.msra.mxu0 0
        %486 = vmatprep.subr.bf16.mxu0 0
        %487 = vmatpush1.bf16.msra.mxu0 0
        %488 = vmatprep.subr.bf16.mxu0 0
        %489 = vmatpush1.bf16.msra.mxu0 0
        %490 = vmatprep.subr.bf16.mxu0 0
        %491 = vmatpush1.bf16.msra.mxu0 0
        %492 = vmatprep.subr.bf16.mxu0 0
        %493 = vmatpush1.bf16.msra.mxu0 0
        %494 = vmatprep.subr.bf16.mxu0 0
        %495 = vmatpush1.bf16.msra.mxu0 0
        %496 = vmatprep.subr.bf16.mxu0 0
        %497 = vmatpush1.bf16.msra.mxu0 0
        %498 = vmatprep.mubr.bf16.mxu0 0
        %499 = vmatmul.mubr.bf16.gmra.mrb[0].mxu0 %v464
        %v500 = vpop.f32.mrb[0].mxu0
        %v501 = vadd.f32 %v448, %v500
        %v502 = vpop.f32.mrb[0].mxu0
        %v503 = vpop.f32.mrb[0].mxu0
        %v504 = vpop.f32.mrb[0].mxu0
        %505 = vdwg.mxu0
        %v506 = vpack.c.bf16 %v501, %v501
        %vm507 = vcmask 257024
        %508 = vst.msk [vmem:[#allocation2] sm:$0xf] %vm507, %v506
        %v509 = vld [vmem:[%s1] sm:$0xf]
        %v510 = vld [vmem:[%s1 + $0x4] sm:$0xf]
        %v511 = vld [vmem:[%s1 + $0x8] sm:$0xf]
        %v512 = vld [vmem:[%s1 + $0xc] sm:$0xf]
        %v513 = vld [vmem:[%s2] sm:$0x1]
        %v515 = vlaneseq
        %v516 = vshrl.u32 %v515, 7
        %v517 = vsub.s32 0, %v516
        %v518 = vrot.slane %v513, %v517
        %v523 = vunpack.c.l.b16 %v509
        %v524 = vunpack.c.l.b16 %v510
        %v525 = vunpack.c.l.b16 %v511
        %v526 = vunpack.c.l.b16 %v512
        %v527 = vpack.c.b16 %v524, %v523
        %v528 = vpack.c.b16 %v526, %v525
        %529 = vrot.lane.b32.xlu0 %v527, 96
        %v530 = vpop.permute.xlu0 %529
        %531 = vrot.lane.b32.xlu0 %v528, 96
        %v532 = vpop.permute.xlu0 %531
        %535 = vrot.lane.b32.xlu0 %v518, 96
        %v536 = vpop.permute.xlu0 %535
        %538 = vmatprep.subr.bf16.mxu0 0
        %539 = vmatpush1.bf16.msra.mxu0 %v530
        %540 = vmatprep.subr.bf16.mxu0 0
        %541 = vmatpush1.bf16.msra.mxu0 %v532
        %542 = vmatprep.subr.bf16.mxu0 0
        %543 = vmatpush1.bf16.msra.mxu0 0
        %544 = vmatprep.subr.bf16.mxu0 0
        %545 = vmatpush1.bf16.msra.mxu0 0
        %546 = vmatprep.subr.bf16.mxu0 0
        %547 = vmatpush1.bf16.msra.mxu0 0
        %548 = vmatprep.subr.bf16.mxu0 0
        %549 = vmatpush1.bf16.msra.mxu0 0
        %550 = vmatprep.subr.bf16.mxu0 0
        %551 = vmatpush1.bf16.msra.mxu0 0
        %552 = vmatprep.subr.bf16.mxu0 0
        %553 = vmatpush1.bf16.msra.mxu0 0
        %554 = vmatprep.subr.bf16.mxu0 0
        %555 = vmatpush1.bf16.msra.mxu0 0
        %556 = vmatprep.subr.bf16.mxu0 0
        %557 = vmatpush1.bf16.msra.mxu0 0
        %558 = vmatprep.subr.bf16.mxu0 0
        %559 = vmatpush1.bf16.msra.mxu0 0
        %560 = vmatprep.subr.bf16.mxu0 0
        %561 = vmatpush1.bf16.msra.mxu0 0
        %562 = vmatprep.subr.bf16.mxu0 0
        %563 = vmatpush1.bf16.msra.mxu0 0
        %564 = vmatprep.subr.bf16.mxu0 0
        %565 = vmatpush1.bf16.msra.mxu0 0
        %566 = vmatprep.subr.bf16.mxu0 0
        %567 = vmatpush1.bf16.msra.mxu0 0
        %568 = vmatprep.subr.bf16.mxu0 0
        %569 = vmatpush1.bf16.msra.mxu0 0
        %570 = vmatprep.mubr.bf16.mxu0 0
        %571 = vmatmul.mubr.bf16.gmra.mrb[0].mxu0 %v464
        %v572 = vpop.f32.mrb[0].mxu0
        %v573 = vadd.f32 %v536, %v572
        %v574 = vpop.f32.mrb[0].mxu0
        %v575 = vpop.f32.mrb[0].mxu0
        %v576 = vpop.f32.mrb[0].mxu0
        %577 = vdwg.mxu0
        %v578 = vpack.c.bf16 %v573, %v573
        %v580 = vunpack.c.l.b16 %v578
        %v581 = vpack.c.b16 %v580, %v580
        %582 = vrot.lane.b32.xlu0 %v581, 32
        %v583 = vpop.permute.xlu0 %582
        %vm585 = vcmask 519424
        %586 = vst.msk [vmem:[#allocation2] sm:$0xf] %vm585, %v583
        %v587 = vld [vmem:[%s1] sm:$0xf]
        %v588 = vld [vmem:[%s1 + $0x4] sm:$0xf]
        %v589 = vld [vmem:[%s1 + $0x8] sm:$0xf]
        %v590 = vld [vmem:[%s1 + $0xc] sm:$0xf]
        %v591 = vld [vmem:[%s2] sm:$0x1]
        %v593 = vlaneseq
        %v594 = vshrl.u32 %v593, 7
        %v595 = vsub.s32 0, %v594
        %v596 = vrot.slane %v591, %v595
        %v601 = vunpack.c.l.b16 %v587
        %v602 = vunpack.c.l.b16 %v588
        %v603 = vunpack.c.l.b16 %v589
        %v604 = vunpack.c.l.b16 %v590
        %v605 = vpack.c.b16 %v602, %v601
        %v606 = vpack.c.b16 %v604, %v603
        %607 = vrot.lane.b32.xlu0 %v605, 64
        %v608 = vpop.permute.xlu0 %607
        %609 = vrot.lane.b32.xlu0 %v606, 64
        %v610 = vpop.permute.xlu0 %609
        %613 = vrot.lane.b32.xlu0 %v596, 64
        %v614 = vpop.permute.xlu0 %613
        %616 = vmatprep.subr.bf16.mxu0 0
        %617 = vmatpush1.bf16.msra.mxu0 %v608
        %618 = vmatprep.subr.bf16.mxu0 0
        %619 = vmatpush1.bf16.msra.mxu0 %v610
        %620 = vmatprep.subr.bf16.mxu0 0
        %621 = vmatpush1.bf16.msra.mxu0 0
        %622 = vmatprep.subr.bf16.mxu0 0
        %623 = vmatpush1.bf16.msra.mxu0 0
        %624 = vmatprep.subr.bf16.mxu0 0
        %625 = vmatpush1.bf16.msra.mxu0 0
        %626 = vmatprep.subr.bf16.mxu0 0
        %627 = vmatpush1.bf16.msra.mxu0 0
        %628 = vmatprep.subr.bf16.mxu0 0
        %629 = vmatpush1.bf16.msra.mxu0 0
        %630 = vmatprep.subr.bf16.mxu0 0
        %631 = vmatpush1.bf16.msra.mxu0 0
        %632 = vmatprep.subr.bf16.mxu0 0
        %633 = vmatpush1.bf16.msra.mxu0 0
        %634 = vmatprep.subr.bf16.mxu0 0
        %635 = vmatpush1.bf16.msra.mxu0 0
        %636 = vmatprep.subr.bf16.mxu0 0
        %637 = vmatpush1.bf16.msra.mxu0 0
        %638 = vmatprep.subr.bf16.mxu0 0
        %639 = vmatpush1.bf16.msra.mxu0 0
        %640 = vmatprep.subr.bf16.mxu0 0
        %641 = vmatpush1.bf16.msra.mxu0 0
        %642 = vmatprep.subr.bf16.mxu0 0
        %643 = vmatpush1.bf16.msra.mxu0 0
        %644 = vmatprep.subr.bf16.mxu0 0
        %645 = vmatpush1.bf16.msra.mxu0 0
        %646 = vmatprep.subr.bf16.mxu0 0
        %647 = vmatpush1.bf16.msra.mxu0 0
        %648 = vmatprep.mubr.bf16.mxu0 0
        %649 = vmatmul.mubr.bf16.gmra.mrb[0].mxu0 %v464
        %v650 = vpop.f32.mrb[0].mxu0
        %v651 = vadd.f32 %v614, %v650
        %v652 = vpop.f32.mrb[0].mxu0
        %v653 = vpop.f32.mrb[0].mxu0
        %v654 = vpop.f32.mrb[0].mxu0
        %655 = vdwg.mxu0
        %v656 = vpack.c.bf16 %v651, %v651
        %v658 = vunpack.c.l.b16 %v656
        %v659 = vpack.c.b16 %v658, %v658
        %660 = vrot.lane.b32.xlu0 %v659, 64
        %v661 = vpop.permute.xlu0 %660
        %vm663 = vcmask 781824
        %664 = vst.msk [vmem:[#allocation2] sm:$0xf] %vm663, %v661
        %v665 = vlaneseq
        %v666 = vshrl.u32 %v665, 7
        %v667 = vlaneseq
        %v668 = vand.u32 %v667, 127
        %vm669 = vcmp.ge.s32.totalorder %v666, %v668
        %v670 = vld [vmem:[#allocation2] sm:$0xf]
        %v672 = vunpack.c.l.b16 %v670
        %v673 = vpack.c.b16 %v672, %v672
        %674 = vrot.lane.b32.xlu0 %v673, 96
        %v675 = vpop.permute.xlu0 %674
        %vm676 = vcmask 130048
        %v678 = vsel %vm676, %v670, 0
        %v681 = vsel %vm676, %v675, 0
        %683 = vmatprep.subr.bf16.mxu0 0
        %684 = vmatpush1.bf16.xpose.msra.mxu0 %v681
        %685 = vmatprep.subr.bf16.mxu0 0
        %686 = vmatpush1.bf16.xpose.msra.mxu0 0
        %687 = vmatprep.subr.bf16.mxu0 0
        %688 = vmatpush1.bf16.xpose.msra.mxu0 0
        %689 = vmatprep.subr.bf16.mxu0 0
        %690 = vmatpush1.bf16.xpose.msra.mxu0 0
        %691 = vmatprep.subr.bf16.mxu0 0
        %692 = vmatpush1.bf16.xpose.msra.mxu0 0
        %693 = vmatprep.subr.bf16.mxu0 0
        %694 = vmatpush1.bf16.xpose.msra.mxu0 0
        %695 = vmatprep.subr.bf16.mxu0 0
        %696 = vmatpush1.bf16.xpose.msra.mxu0 0
        %697 = vmatprep.subr.bf16.mxu0 0
        %698 = vmatpush1.bf16.xpose.msra.mxu0 0
        %699 = vmatprep.subr.bf16.mxu0 0
        %700 = vmatpush1.bf16.xpose.msra.mxu0 0
        %701 = vmatprep.subr.bf16.mxu0 0
        %702 = vmatpush1.bf16.xpose.msra.mxu0 0
        %703 = vmatprep.subr.bf16.mxu0 0
        %704 = vmatpush1.bf16.xpose.msra.mxu0 0
        %705 = vmatprep.subr.bf16.mxu0 0
        %706 = vmatpush1.bf16.xpose.msra.mxu0 0
        %707 = vmatprep.subr.bf16.mxu0 0
        %708 = vmatpush1.bf16.xpose.msra.mxu0 0
        %709 = vmatprep.subr.bf16.mxu0 0
        %710 = vmatpush1.bf16.xpose.msra.mxu0 0
        %711 = vmatprep.subr.bf16.mxu0 0
        %712 = vmatpush1.bf16.xpose.msra.mxu0 0
        %713 = vmatprep.subr.bf16.mxu0 0
        %714 = vmatpush1.bf16.xpose.msra.mxu0 0
        %715 = vmatprep.mubr.bf16.mxu0 0
        %716 = vmatmul.mubr.bf16.gmra.mrb[0].mxu0 %v678
        %v717 = vpop.f32.mrb[0].mxu0
        %v718 = vadd.f32 0.0, %v717
        %v719 = vpop.f32.mrb[0].mxu0
        %v720 = vpop.f32.mrb[0].mxu0
        %v721 = vpop.f32.mrb[0].mxu0
        %722 = vdwg.mxu0
        %v723 = vsel %vm669, %v718, -1e+30
        %vm724 = vcmask 64512
        %v725 = vsel %vm724, %v723, -inf
        %726 = vmax.xlane.f32.xlu0 %v725
        %v727 = vpop.xlane.xlu0 %726
        %v728 = vsub.f32 -inf, %v727
        %v729 = vmul.f32 %v728, 1.442695
        %v730 = vpow.pop %v729
        %v731 = vsub.f32 %v723, %v727
        %v732 = vmul.f32 %v731, 1.442695
        %v733 = vpow.pop %v732
        %v734 = vmul.f32 %v730, 0.0
        %v735 = vsel %vm724, %v733, 0.0
        %736 = vadd.xlane.f32.xlu0 %v735
        %v737 = vpop.xlane.xlu0 %736
        %v738 = vadd.f32 %v734, %v737
        %v739 = vpack.c.bf16 %v733, %v733
        %740 = vrot.lane.b32.xlu0 %v673, 64
        %v741 = vpop.permute.xlu0 %740
        %v743 = vsel %vm724, %v739, 0
        %vm745 = vcmask 1043456
        %v747 = vsel %vm745, %v741, 0
        %749 = vmatprep.subr.bf16.mxu0 0
        %750 = vmatpush1.bf16.msra.mxu0 %v747
        %751 = vmatprep.subr.bf16.mxu0 0
        %752 = vmatpush1.bf16.msra.mxu0 0
        %753 = vmatprep.subr.bf16.mxu0 0
        %754 = vmatpush1.bf16.msra.mxu0 0
        %755 = vmatprep.subr.bf16.mxu0 0
        %756 = vmatpush1.bf16.msra.mxu0 0
        %757 = vmatprep.subr.bf16.mxu0 0
        %758 = vmatpush1.bf16.msra.mxu0 0
        %759 = vmatprep.subr.bf16.mxu0 0
        %760 = vmatpush1.bf16.msra.mxu0 0
        %761 = vmatprep.subr.bf16.mxu0 0
        %762 = vmatpush1.bf16.msra.mxu0 0
        %763 = vmatprep.subr.bf16.mxu0 0
        %764 = vmatpush1.bf16.msra.mxu0 0
        %765 = vmatprep.subr.bf16.mxu0 0
        %766 = vmatpush1.bf16.msra.mxu0 0
        %767 = vmatprep.subr.bf16.mxu0 0
        %768 = vmatpush1.bf16.msra.mxu0 0
        %769 = vmatprep.subr.bf16.mxu0 0
        %770 = vmatpush1.bf16.msra.mxu0 0
        %771 = vmatprep.subr.bf16.mxu0 0
        %772 = vmatpush1.bf16.msra.mxu0 0
        %773 = vmatprep.subr.bf16.mxu0 0
        %774 = vmatpush1.bf16.msra.mxu0 0
        %775 = vmatprep.subr.bf16.mxu0 0
        %776 = vmatpush1.bf16.msra.mxu0 0
        %777 = vmatprep.subr.bf16.mxu0 0
        %778 = vmatpush1.bf16.msra.mxu0 0
        %779 = vmatprep.subr.bf16.mxu0 0
        %780 = vmatpush1.bf16.msra.mxu0 0
        %781 = vmatprep.mubr.bf16.mxu0 0
        %782 = vmatmul.mubr.bf16.gmra.mrb[0].mxu0 %v743
        %v783 = vpop.f32.mrb[0].mxu0
        %v784 = vadd.f32 0.0, %v783
        %v785 = vpop.f32.mrb[0].mxu0
        %v786 = vpop.f32.mrb[0].mxu0
        %v787 = vpop.f32.mrb[0].mxu0
        %788 = vdwg.mxu0
        %v789 = vadd.f32 %v734, %v784
        %v790 = vrcp.pop %v738
        %v791 = vmul.f32 %v789, %v790
        %v792 = vpack.c.bf16 %v791, %v791
        %vm793 = vcmask 125952
        %794 = vst.msk [vmem:[#allocation3] sm:$0xf] %vm793, %v792
        %v795 = vld [vmem:[#allocation2] sm:$0xf]
        %v797 = vunpack.c.l.b16 %v795
        %v798 = vpack.c.b16 %v797, %v797
        %799 = vrot.lane.b32.xlu0 %v798, 112
        %v800 = vpop.permute.xlu0 %799
        %801 = vrot.lane.b32.xlu0 %v798, 80
        %v802 = vpop.permute.xlu0 %801
        %v804 = vsel %vm676, %v800, 0
        %v807 = vsel %vm676, %v802, 0
        %809 = vmatprep.subr.bf16.mxu0 0
        %810 = vmatpush1.bf16.xpose.msra.mxu0 %v807
        %811 = vmatprep.subr.bf16.mxu0 0
        %812 = vmatpush1.bf16.xpose.msra.mxu0 0
        %813 = vmatprep.subr.bf16.mxu0 0
        %814 = vmatpush1.bf16.xpose.msra.mxu0 0
        %815 = vmatprep.subr.bf16.mxu0 0
        %816 = vmatpush1.bf16.xpose.msra.mxu0 0
        %817 = vmatprep.subr.bf16.mxu0 0
        %818 = vmatpush1.bf16.xpose.msra.mxu0 0
        %819 = vmatprep.subr.bf16.mxu0 0
        %820 = vmatpush1.bf16.xpose.msra.mxu0 0
        %821 = vmatprep.subr.bf16.mxu0 0
        %822 = vmatpush1.bf16.xpose.msra.mxu0 0
        %823 = vmatprep.subr.bf16.mxu0 0
        %824 = vmatpush1.bf16.xpose.msra.mxu0 0
        %825 = vmatprep.subr.bf16.mxu0 0
        %826 = vmatpush1.bf16.xpose.msra.mxu0 0
        %827 = vmatprep.subr.bf16.mxu0 0
        %828 = vmatpush1.bf16.xpose.msra.mxu0 0
        %829 = vmatprep.subr.bf16.mxu0 0
        %830 = vmatpush1.bf16.xpose.msra.mxu0 0
        %831 = vmatprep.subr.bf16.mxu0 0
        %832 = vmatpush1.bf16.xpose.msra.mxu0 0
        %833 = vmatprep.subr.bf16.mxu0 0
        %834 = vmatpush1.bf16.xpose.msra.mxu0 0
        %835 = vmatprep.subr.bf16.mxu0 0
        %836 = vmatpush1.bf16.xpose.msra.mxu0 0
        %837 = vmatprep.subr.bf16.mxu0 0
        %838 = vmatpush1.bf16.xpose.msra.mxu0 0
        %839 = vmatprep.subr.bf16.mxu0 0
        %840 = vmatpush1.bf16.xpose.msra.mxu0 0
        %841 = vmatprep.mubr.bf16.mxu0 0
        %842 = vmatmul.mubr.bf16.gmra.mrb[0].mxu0 %v804
        %v843 = vpop.f32.mrb[0].mxu0
        %v844 = vadd.f32 0.0, %v843
        %v845 = vpop.f32.mrb[0].mxu0
        %v846 = vpop.f32.mrb[0].mxu0
        %v847 = vpop.f32.mrb[0].mxu0
        %848 = vdwg.mxu0
        %v849 = vsel %vm669, %v844, -1e+30
        %v850 = vsel %vm724, %v849, -inf
        %851 = vmax.xlane.f32.xlu0 %v850
        %v852 = vpop.xlane.xlu0 %851
        %v853 = vsub.f32 -inf, %v852
        %v854 = vmul.f32 %v853, 1.442695
        %v855 = vpow.pop %v854
        %v856 = vsub.f32 %v849, %v852
        %v857 = vmul.f32 %v856, 1.442695
        %v858 = vpow.pop %v857
        %v859 = vmul.f32 %v855, 0.0
        %v860 = vsel %vm724, %v858, 0.0
        %861 = vadd.xlane.f32.xlu0 %v860
        %v862 = vpop.xlane.xlu0 %861
        %v863 = vadd.f32 %v859, %v862
        %v864 = vpack.c.bf16 %v858, %v858
        %865 = vrot.lane.b32.xlu0 %v798, 48
        %v866 = vpop.permute.xlu0 %865
        %v868 = vsel %vm724, %v864, 0
        %v871 = vsel %vm745, %v866, 0
        %873 = vmatprep.subr.bf16.mxu0 0
        %874 = vmatpush1.bf16.msra.mxu0 %v871
        %875 = vmatprep.subr.bf16.mxu0 0
        %876 = vmatpush1.bf16.msra.mxu0 0
        %877 = vmatprep.subr.bf16.mxu0 0
        %878 = vmatpush1.bf16.msra.mxu0 0
        %879 = vmatprep.subr.bf16.mxu0 0
        %880 = vmatpush1.bf16.msra.mxu0 0
        %881 = vmatprep.subr.bf16.mxu0 0
        %882 = vmatpush1.bf16.msra.mxu0 0
        %883 = vmatprep.subr.bf16.mxu0 0
        %884 = vmatpush1.bf16.msra.mxu0 0
        %885 = vmatprep.subr.bf16.mxu0 0
        %886 = vmatpush1.bf16.msra.mxu0 0
        %887 = vmatprep.subr.bf16.mxu0 0
        %888 = vmatpush1.bf16.msra.mxu0 0
        %889 = vmatprep.subr.bf16.mxu0 0
        %890 = vmatpush1.bf16.msra.mxu0 0
        %891 = vmatprep.subr.bf16.mxu0 0
        %892 = vmatpush1.bf16.msra.mxu0 0
        %893 = vmatprep.subr.bf16.mxu0 0
        %894 = vmatpush1.bf16.msra.mxu0 0
        %895 = vmatprep.subr.bf16.mxu0 0
        %896 = vmatpush1.bf16.msra.mxu0 0
        %897 = vmatprep.subr.bf16.mxu0 0
        %898 = vmatpush1.bf16.msra.mxu0 0
        %899 = vmatprep.subr.bf16.mxu0 0
        %900 = vmatpush1.bf16.msra.mxu0 0
        %901 = vmatprep.subr.bf16.mxu0 0
        %902 = vmatpush1.bf16.msra.mxu0 0
        %903 = vmatprep.subr.bf16.mxu0 0
        %904 = vmatpush1.bf16.msra.mxu0 0
        %905 = vmatprep.mubr.bf16.mxu0 0
        %906 = vmatmul.mubr.bf16.gmra.mrb[0].mxu0 %v868
        %v907 = vpop.f32.mrb[0].mxu0
        %v908 = vadd.f32 0.0, %v907
        %v909 = vpop.f32.mrb[0].mxu0
        %v910 = vpop.f32.mrb[0].mxu0
        %v911 = vpop.f32.mrb[0].mxu0
        %912 = vdwg.mxu0
        %v913 = vadd.f32 %v859, %v908
        %v914 = vrcp.pop %v863
        %v915 = vmul.f32 %v913, %v914
        %v916 = vpack.c.bf16 %v915, %v915
        %v918 = vunpack.c.l.b16 %v916
        %v919 = vpack.c.b16 %v918, %v918
        %920 = vrot.lane.b32.xlu0 %v919, 16
        %v921 = vpop.permute.xlu0 %920
        %vm923 = vcmask 257152
        %924 = vst.msk [vmem:[#allocation3] sm:$0xf] %vm923, %v921
        %v925 = vld [vmem:[#allocation3] sm:$0xf]
        %v926 = vld [vmem:[%s3] sm:$0xf]
        %v927 = vld [vmem:[%s3 + $0x4] sm:$0xf]
        %v928 = vld [vmem:[%s3 + $0x8] sm:$0xf]
        %v929 = vld [vmem:[%s3 + $0xc] sm:$0xf]
        %v930 = vld [vmem:[%s4] sm:$0x1]
        %v932 = vlaneseq
        %v933 = vshrl.u32 %v932, 7
        %v934 = vsub.s32 0, %v933
        %v935 = vrot.slane %v930, %v934
        %v941 = vunpack.c.l.b16 %v926
        %v942 = vunpack.c.l.b16 %v927
        %v943 = vunpack.c.l.b16 %v928
        %v944 = vunpack.c.l.b16 %v929
        %v945 = vpack.c.b16 %v942, %v941
        %v946 = vpack.c.b16 %v944, %v943
        %v950 = vsel %vm462, %v925, 0
        %952 = vmatprep.subr.bf16.mxu0 0
        %953 = vmatpush1.bf16.msra.mxu0 %v945
        %954 = vmatprep.subr.bf16.mxu0 0
        %955 = vmatpush1.bf16.msra.mxu0 %v946
        %956 = vmatprep.subr.bf16.mxu0 0
        %957 = vmatpush1.bf16.msra.mxu0 0
        %958 = vmatprep.subr.bf16.mxu0 0
        %959 = vmatpush1.bf16.msra.mxu0 0
        %960 = vmatprep.subr.bf16.mxu0 0
        %961 = vmatpush1.bf16.msra.mxu0 0
        %962 = vmatprep.subr.bf16.mxu0 0
        %963 = vmatpush1.bf16.msra.mxu0 0
        %964 = vmatprep.subr.bf16.mxu0 0
        %965 = vmatpush1.bf16.msra.mxu0 0
        %966 = vmatprep.subr.bf16.mxu0 0
        %967 = vmatpush1.bf16.msra.mxu0 0
        %968 = vmatprep.subr.bf16.mxu0 0
        %969 = vmatpush1.bf16.msra.mxu0 0
        %970 = vmatprep.subr.bf16.mxu0 0
        %971 = vmatpush1.bf16.msra.mxu0 0
        %972 = vmatprep.subr.bf16.mxu0 0
        %973 = vmatpush1.bf16.msra.mxu0 0
        %974 = vmatprep.subr.bf16.mxu0 0
        %975 = vmatpush1.bf16.msra.mxu0 0
        %976 = vmatprep.subr.bf16.mxu0 0
        %977 = vmatpush1.bf16.msra.mxu0 0
        %978 = vmatprep.subr.bf16.mxu0 0
        %979 = vmatpush1.bf16.msra.mxu0 0
        %980 = vmatprep.subr.bf16.mxu0 0
        %981 = vmatpush1.bf16.msra.mxu0 0
        %982 = vmatprep.subr.bf16.mxu0 0
        %983 = vmatpush1.bf16.msra.mxu0 0
        %984 = vmatprep.mubr.bf16.mxu0 0
        %985 = vmatmul.mubr.bf16.gmra.mrb[0].mxu0 %v950
        %v986 = vpop.f32.mrb[0].mxu0
        %v987 = vadd.f32 %v935, %v986
        %v988 = vpop.f32.mrb[0].mxu0
        %v989 = vpop.f32.mrb[0].mxu0
        %v990 = vpop.f32.mrb[0].mxu0
        %991 = vdwg.mxu0
        %v992 = vadd.f32 %v437, %v987
        %v993 = vld [vmem:[%s5] sm:$0x1]
        %v994 = vld [vmem:[%s6] sm:$0x1]
        %v995 = vsel %vm462, %v992, 0.0
        %996 = vadd.xlane.f32.xlu0 %v995
        %v997 = vpop.xlane.xlu0 %996
        %v998 = vrcp.pop 32.0
        %v999 = vmul.f32 %v997, %v998
        %v1000 = vsub.f32 %v992, %v999
        %v1001 = vmul.f32 %v1000, %v1000
        %v1002 = vsel %vm462, %v1001, 0.0
        %1003 = vadd.xlane.f32.xlu0 %v1002
        %v1004 = vpop.xlane.xlu0 %1003
        %v1005 = vmul.f32 %v1004, %v998
        %v1006 = vadd.f32 %v1005, 1e-05
        %v1007 = vrsqrt.pop %v1006
        %v1008 = vmul.f32 %v1000, %v1007
        %v1010 = vlaneseq
        %v1011 = vshrl.u32 %v1010, 7
        %v1012 = vsub.s32 0, %v1011
        %v1013 = vrot.slane %v993, %v1012
        %v1015 = vmul.f32 %v1008, %v1013
        %v1017 = vlaneseq
        %v1018 = vshrl.u32 %v1017, 7
        %v1019 = vsub.s32 0, %v1018
        %v1020 = vrot.slane %v994, %v1019
        %v1022 = vadd.f32 %v1015, %v1020
        %v1023 = vpack.c.bf16 %v1022, %v1022
        %v1024 = vld [vmem:[%s7] sm:$0xf]
        %v1025 = vld [vmem:[%s7 + $0x4] sm:$0xf]
        %v1026 = vld [vmem:[%s7 + $0x8] sm:$0xf]
        %v1027 = vld [vmem:[%s7 + $0xc] sm:$0xf]
        %v1028 = vld [vmem:[%s8] sm:$0x1]
        %v1030 = vlaneseq
        %v1031 = vshrl.u32 %v1030, 7
        %v1032 = vsub.s32 0, %v1031
        %v1033 = vrot.slane %v1028, %v1032
        %v1039 = vunpack.c.l.b16 %v1024
        %v1040 = vunpack.c.l.b16 %v1025
        %v1041 = vunpack.c.l.b16 %v1026
        %v1042 = vunpack.c.l.b16 %v1027
        %v1043 = vpack.c.b16 %v1040, %v1039
        %v1044 = vpack.c.b16 %v1042, %v1041
        %v1048 = vsel %vm462, %v1023, 0
        %1050 = vmatprep.subr.bf16.mxu0 0
        %1051 = vmatpush1.bf16.msra.mxu0 %v1043
        %1052 = vmatprep.subr.bf16.mxu0 0
        %1053 = vmatpush1.bf16.msra.mxu0 %v1044
        %1054 = vmatprep.subr.bf16.mxu0 0
        %1055 = vmatpush1.bf16.msra.mxu0 0
        %1056 = vmatprep.subr.bf16.mxu0 0
        %1057 = vmatpush1.bf16.msra.mxu0 0
        %1058 = vmatprep.subr.bf16.mxu0 0
        %1059 = vmatpush1.bf16.msra.mxu0 0
        %1060 = vmatprep.subr.bf16.mxu0 0
        %1061 = vmatpush1.bf16.msra.mxu0 0
        %1062 = vmatprep.subr.bf16.mxu0 0
        %1063 = vmatpush1.bf16.msra.mxu0 0
        %1064 = vmatprep.subr.bf16.mxu0 0
        %1065 = vmatpush1.bf16.msra.mxu0 0
        %1066 = vmatprep.subr.bf16.mxu0 0
        %1067 = vmatpush1.bf16.msra.mxu0 0
        %1068 = vmatprep.subr.bf16.mxu0 0
        %1069 = vmatpush1.bf16.msra.mxu0 0
        %1070 = vmatprep.subr.bf16.mxu0 0
        %1071 = vmatpush1.bf16.msra.mxu0 0
        %1072 = vmatprep.subr.bf16.mxu0 0
        %1073 = vmatpush1.bf16.msra.mxu0 0
        %1074 = vmatprep.subr.bf16.mxu0 0
        %1075 = vmatpush1.bf16.msra.mxu0 0
        %1076 = vmatprep.subr.bf16.mxu0 0
        %1077 = vmatpush1.bf16.msra.mxu0 0
        %1078 = vmatprep.subr.bf16.mxu0 0
        %1079 = vmatpush1.bf16.msra.mxu0 0
        %1080 = vmatprep.subr.bf16.mxu0 0
        %1081 = vmatpush1.bf16.msra.mxu0 0
        %1082 = vmatprep.mubr.bf16.mxu0 0
        %1083 = vmatmul.mubr.bf16.gmra.mrb[0].mxu0 %v1048
        %v1084 = vpop.f32.mrb[0].mxu0
        %v1085 = vadd.f32 %v1033, %v1084
        %v1086 = vpop.f32.mrb[0].mxu0
        %v1087 = vpop.f32.mrb[0].mxu0
        %v1088 = vpop.f32.mrb[0].mxu0
        %1089 = vdwg.mxu0
        %v1090 = vmax.f32 %v1085, 0.0
        %v1091 = vpack.c.bf16 %v1090, %v1090
        %v1092 = vld [vmem:[%s9] sm:$0xf]
        %v1093 = vld [vmem:[%s9 + $0x4] sm:$0xf]
        %v1094 = vld [vmem:[%s9 + $0x8] sm:$0xf]
        %v1095 = vld [vmem:[%s9 + $0xc] sm:$0xf]
        %v1096 = vld [vmem:[%s9 + $0x10] sm:$0xf]
        %v1097 = vld [vmem:[%s9 + $0x14] sm:$0xf]
        %v1098 = vld [vmem:[%s9 + $0x18] sm:$0xf]
        %v1099 = vld [vmem:[%s9 + $0x1c] sm:$0xf]
        %v1100 = vld [vmem:[%s9 + $0x20] sm:$0xf]
        %v1101 = vld [vmem:[%s9 + $0x24] sm:$0xf]
        %v1102 = vld [vmem:[%s9 + $0x28] sm:$0xf]
        %v1103 = vld [vmem:[%s9 + $0x2c] sm:$0xf]
        %v1104 = vld [vmem:[%s9 + $0x30] sm:$0xf]
        %v1105 = vld [vmem:[%s9 + $0x34] sm:$0xf]
        %v1106 = vld [vmem:[%s9 + $0x38] sm:$0xf]
        %v1107 = vld [vmem:[%s9 + $0x3c] sm:$0xf]
        %v1108 = vld [vmem:[%s10] sm:$0x1]
        %v1110 = vlaneseq
        %v1111 = vshrl.u32 %v1110, 7
        %v1112 = vsub.s32 0, %v1111
        %v1113 = vrot.slane %v1108, %v1112
        %v1131 = vunpack.c.l.b16 %v1092
        %v1132 = vunpack.c.l.b16 %v1093
        %v1133 = vunpack.c.l.b16 %v1094
        %v1134 = vunpack.c.l.b16 %v1095
        %v1135 = vunpack.c.l.b16 %v1096
        %v1136 = vunpack.c.l.b16 %v1097
        %v1137 = vunpack.c.l.b16 %v1098
        %v1138 = vunpack.c.l.b16 %v1099
        %v1139 = vunpack.c.l.b16 %v1100
        %v1140 = vunpack.c.l.b16 %v1101
        %v1141 = vunpack.c.l.b16 %v1102
        %v1142 = vunpack.c.l.b16 %v1103
        %v1143 = vunpack.c.l.b16 %v1104
        %v1144 = vunpack.c.l.b16 %v1105
        %v1145 = vunpack.c.l.b16 %v1106
        %v1146 = vunpack.c.l.b16 %v1107
        %v1147 = vpack.c.b16 %v1132, %v1131
        %v1148 = vpack.c.b16 %v1134, %v1133
        %v1149 = vpack.c.b16 %v1136, %v1135
        %v1150 = vpack.c.b16 %v1138, %v1137
        %v1151 = vpack.c.b16 %v1140, %v1139
        %v1152 = vpack.c.b16 %v1142, %v1141
        %v1153 = vpack.c.b16 %v1144, %v1143
        %v1154 = vpack.c.b16 %v1146, %v1145
        %1163 = vmatprep.subr.bf16.mxu0 0
        %1164 = vmatpush1.bf16.msra.mxu0 %v1147
        %1165 = vmatprep.subr.bf16.mxu0 0
        %1166 = vmatpush1.bf16.msra.mxu0 %v1148
        %1167 = vmatprep.subr.bf16.mxu0 0
        %1168 = vmatpush1.bf16.msra.mxu0 %v1149
        %1169 = vmatprep.subr.bf16.mxu0 0
        %1170 = vmatpush1.bf16.msra.mxu0 %v1150
        %1171 = vmatprep.subr.bf16.mxu0 0
        %1172 = vmatpush1.bf16.msra.mxu0 %v1151
        %1173 = vmatprep.subr.bf16.mxu0 0
        %1174 = vmatpush1.bf16.msra.mxu0 %v1152
        %1175 = vmatprep.subr.bf16.mxu0 0
        %1176 = vmatpush1.bf16.msra.mxu0 %v1153
        %1177 = vmatprep.subr.bf16.mxu0 0
        %1178 = vmatpush1.bf16.msra.mxu0 %v1154
        %1179 = vmatprep.subr.bf16.mxu0 0
        %1180 = vmatpush1.bf16.msra.mxu0 0
        %1181 = vmatprep.subr.bf16.mxu0 0
        %1182 = vmatpush1.bf16.msra.mxu0 0
        %1183 = vmatprep.subr.bf16.mxu0 0
        %1184 = vmatpush1.bf16.msra.mxu0 0
        %1185 = vmatprep.subr.bf16.mxu0 0
        %1186 = vmatpush1.bf16.msra.mxu0 0
        %1187 = vmatprep.subr.bf16.mxu0 0
        %1188 = vmatpush1.bf16.msra.mxu0 0
        %1189 = vmatprep.subr.bf16.mxu0 0
        %1190 = vmatpush1.bf16.msra.mxu0 0
        %1191 = vmatprep.subr.bf16.mxu0 0
        %1192 = vmatpush1.bf16.msra.mxu0 0
        %1193 = vmatprep.subr.bf16.mxu0 0
        %1194 = vmatpush1.bf16.msra.mxu0 0
        %1195 = vmatprep.mubr.bf16.mxu0 0
        %1196 = vmatmul.mubr.bf16.gmra.mrb[0].mxu0 %v1091
        %v1197 = vpop.f32.mrb[0].mxu0
        %v1198 = vadd.f32 %v1113, %v1197
        %v1199 = vpop.f32.mrb[0].mxu0
        %v1200 = vpop.f32.mrb[0].mxu0
        %v1201 = vpop.f32.mrb[0].mxu0
        %1202 = vdwg.mxu0
        %v1203 = vadd.f32 %v1022, %v1198
        %v1204 = vld [vmem:[%s11] sm:$0x1]
        %v1205 = vld [vmem:[%s12] sm:$0x1]
        %v1206 = vsel %vm462, %v1203, 0.0
        %1207 = vadd.xlane.f32.xlu0 %v1206
        %v1208 = vpop.xlane.xlu0 %1207
        %v1209 = vmul.f32 %v1208, %v998
        %v1210 = vsub.f32 %v1203, %v1209
        %v1211 = vmul.f32 %v1210, %v1210
        %v1212 = vsel %vm462, %v1211, 0.0
        %1213 = vadd.xlane.f32.xlu0 %v1212
        %v1214 = vpop.xlane.xlu0 %1213
        %v1215 = vmul.f32 %v1214, %v998
        %v1216 = vadd.f32 %v1215, 1e-05
        %v1217 = vrsqrt.pop %v1216
        %v1218 = vmul.f32 %v1210, %v1217
        %v1220 = vlaneseq
        %v1221 = vshrl.u32 %v1220, 7
        %v1222 = vsub.s32 0, %v1221
        %v1223 = vrot.slane %v1204, %v1222
        %v1225 = vmul.f32 %v1218, %v1223
        %v1227 = vlaneseq
        %v1228 = vshrl.u32 %v1227, 7
        %v1229 = vsub.s32 0, %v1228
        %v1230 = vrot.slane %v1205, %v1229
        %v1232 = vadd.f32 %v1225, %v1230
        %1233 = vst.msk [vmem:[%s431] sm:$0xff] %vm462, %v1232
        %s1234 = sand.u32 %s313, 1
        %s1235 = scalar_lea.sflag [#allocation5], %s1234
        %s1236 = sand.u32 %s313, 1
        %s1237 = smul.addr %s1236, 8
        %s1238 = scalar_lea.vmem [#allocation4], %s1237
        // Predicated region
        $region73: #{tpu_custom_call.1} parent=71 // pred_check
          %p1239 = pneg %p323
        $region74: #{tpu_custom_call.1} parent=71 // pred_check_branch
          %1241 = sbr.rel (%p1239) target = $region76
        $region75: #{tpu_custom_call.1} parent=71 // pred_region
          %s1243 = ssub.s32 128, 128
          %1244 = vsyncadd %s1235, %s1243
          %s1245 = smul.addr %s27, 128
          %s1246 = scalar_lea.hbm %s13, %s1245
          %s1248 = sshll.u32 %s1238, 4
          %s1249 = int_to_ptr.vmem [resolvable:$true] %s1248
          %1251 = dma.vmem_to_hbm [thread:$0]  %s1249, 128, %s1246, %s1235
        $region76: #{tpu_custom_call.1} parent=71 // pred_fallthru
          _
      $region72: #{tpu_custom_call.1} parent=5 // pred_fallthru
        _
      %p1252 = scmp.le.s32.totalorder 2, %s22
      // Predicated region
      $region77: #{tpu_custom_call.1} parent=5 // pred_check
        %p1253 = pneg %p1252
      $region78: #{tpu_custom_call.1} parent=5 // pred_check_branch
        %1255 = sbr.rel (%p1253) target = $region80
      $region79: #{tpu_custom_call.1} parent=5 // pred_region
        %s1256 = ssub.s32 %s22, 2
        // Predicated region
        $region81: #{tpu_custom_call.1} parent=79 // pred_check
          %p1257 = pneg %p329
        $region82: #{tpu_custom_call.1} parent=79 // pred_check_branch
          %1259 = sbr.rel (%p1257) target = $region84
        $region83: #{tpu_custom_call.1} parent=79 // pred_region
          %s1260 = sand.u32 %s314, 1
          %s1261 = scalar_lea.sflag [#allocation5], %s1260
          %s1262 = sand.u32 %s314, 1
          %s1263 = smul.addr %s1262, 8
          %s1264 = scalar_lea.vmem [#allocation4], %s1263
          %1265 = dma.done %s1261, 128
        $region84: #{tpu_custom_call.1} parent=79 // pred_fallthru
          _
      $region80: #{tpu_custom_call.1} parent=5 // pred_fallthru
        _
    $region6: #{tpu_custom_call.1} parent=1 // loop_footer
      %s26 = sadd.s32 1, %s22
    $region7: #{tpu_custom_call.1} parent=1 // loop_footer_branch
      %21 = sbr.rel target = $region3
    $region8: #{tpu_custom_call.1} parent=1 // loop_exit
      _
    %1266 = vsyncpa [#allocation5], 1
    %s1267 = scalar_lea.sflag [#allocation5], 1
    %1268 = vsyncpa %s1267, 1

</llo_original>
